<compile_context>
chip_gen: v7x
topology: tpu7x:2x2x1
jax: 0.10.0
libtpu: 0.0.40
codegen_flags: <defaults>
</compile_context>

<pallas_src>
import math
import functools

import jax
import jax.numpy as jnp
from jax import lax
from jax.experimental import pallas as pl
from jax.experimental.pallas import tpu as pltpu  # noqa: F401  (TPU backend; scratch/CompilerParams at production sizes)


def _mha_kernel(x_ref, wq_ref, wk_ref, wv_ref, wo_ref, bo_ref, o_ref, *,
                batch, seq, n_head):
    # x_ref:        (B*S, c_in)  bf16 -- all tokens of all batches, one lane-dense slab
    # wq/wk/wv_ref: (N_head, c_in, c) bf16, pre-transposed; 1/sqrt(c) folded into Wq
    # wo_ref:       (N_head, c, c_in) bf16, pre-split per head
    # bo_ref:       (1, c_in)    f32
    # o_ref:        (B*S, c_in)  f32
    x = x_ref[...]                                    # (B*S, c_in) bf16

    acc = None                                        # f32 (B*S, c_in) accumulator
    # TODO(synk): at production sizes accumulate into a pltpu.VMEM f32 scratch and
    #             switch the head loop to lax.fori_loop to bound vreg pressure.
    for h in range(n_head):                           # static unroll over heads
        # bf16 MXU matmuls, f32 accumulation.  Head select = free leading-dim index.
        qh = jnp.dot(x, wq_ref[h], preferred_element_type=jnp.float32)   # (B*S, c), pre-scaled
        kh = jnp.dot(x, wk_ref[h], preferred_element_type=jnp.float32)   # (B*S, c)
        vh = jnp.dot(x, wv_ref[h], preferred_element_type=jnp.float32)   # (B*S, c)

        # Attention is block-diagonal over batches: small static loop with static,
        # sublane-tile-aligned slices (S == 8 == sublane tile at the test shape).
        outs = []
        for b in range(batch):
            rows = slice(b * seq, (b + 1) * seq)
            qb, kb, vb = qh[rows], kh[rows], vh[rows]                     # (S, c) each
            # Scores: contract last dims of Q and K directly (no explicit transpose).
            s = lax.dot_general(qb, kb, (((1,), (1,)), ((), ())),
                                preferred_element_type=jnp.float32)       # (S, S)
            # Numerically-stable f32 softmax; reciprocal goes to the EUP slot.
            m = jnp.max(s, axis=-1, keepdims=True)
            p = jnp.exp(s - m)
            denom = jnp.sum(p, axis=-1, keepdims=True)
            probs = p * pl.reciprocal(denom, approx=True)
            outs.append(jnp.dot(probs, vb, preferred_element_type=jnp.float32))
        head_out = outs[0] if batch == 1 else jnp.concatenate(outs, axis=0)  # (B*S, c)

        # Per-head accumulate into the output projection (== concat + big matmul).
        proj = jnp.dot(head_out.astype(x.dtype), wo_ref[h],
                       preferred_element_type=jnp.float32)                # (B*S, c_in)
        acc = proj if acc is None else acc + proj

    # Output bias added once in the f32 epilogue; single contiguous store.
    o_ref[...] = (acc + bo_ref[...].astype(jnp.float32)).astype(o_ref.dtype)


def multi_head_attention(x, wq, wk, wv, wo, bo, *, c, n_head):
    """x: (B, S, c_in); wq/wk/wv: (N_head*c, c_in); wo: (c_in, N_head*c); bo: (c_in,)."""
    B, S, c_in = x.shape
    scale = 1.0 / math.sqrt(c)

    # Wrapper-side layout plumbing + bf16 casts (runs once in XLA, outside the kernel):
    #   (Nh*c, c_in) -> (Nh, c_in, c); fold the softmax scale into Wq.
    wq_h = (jnp.transpose(wq.reshape(n_head, c, c_in), (0, 2, 1)) * scale).astype(jnp.bfloat16)
    wk_h = jnp.transpose(wk.reshape(n_head, c, c_in), (0, 2, 1)).astype(jnp.bfloat16)
    wv_h = jnp.transpose(wv.reshape(n_head, c, c_in), (0, 2, 1)).astype(jnp.bfloat16)
    #   (c_in, Nh*c) -> (Nh, c, c_in)
    wo_h = jnp.transpose(wo.reshape(c_in, n_head, c), (1, 2, 0)).astype(jnp.bfloat16)
    bo2d = bo.reshape(1, c_in).astype(jnp.float32)
    #   Flatten (B, S) into one lane-dense token slab; bf16 MXU operand.
    x2 = x.reshape(B * S, c_in).astype(jnp.bfloat16)

    # Advisory cost estimate: 4 projection matmuls + QK^T + PV per head per batch.
    flops = 2 * B * n_head * (4 * S * c_in * c + 2 * S * S * c)
    transcendentals = B * n_head * S * S                        # exp() in softmax
    bytes_accessed = (B * S * c_in * 2                          # x (bf16)
                      + 4 * n_head * c_in * c * 2               # Wq/Wk/Wv/Wo (bf16)
                      + c_in * 4                                # bo (f32)
                      + B * S * c_in * 4)                       # out (f32)

    kernel = functools.partial(_mha_kernel, batch=B, seq=S, n_head=n_head)
    out = pl.pallas_call(
        kernel,
        out_shape=jax.ShapeDtypeStruct((B * S, c_in), jnp.float32),
        cost_estimate=pl.CostEstimate(flops=flops,
                                      transcendentals=transcendentals,
                                      bytes_accessed=bytes_accessed),
    )(x2, wq_h, wk_h, wv_h, wo_h, bo2d)
    return out.reshape(B, S, c_in).astype(x.dtype)


def _reference(x, wq, wk, wv, wo, bo, *, c, n_head):
    """Pure-JAX f32 reference matching the PyTorch forward (bias=None, mask=None)."""
    B, S, c_in = x.shape
    q = x @ wq.T
    k = x @ wk.T
    v = x @ wv.T

    def split(t):
        return jnp.moveaxis(t.reshape(B, S, n_head, c), -2, -3)            # (B, Nh, S, c)

    Q, K, V = split(q), split(k), split(v)
    attn = jnp.einsum('...qc,...kc->...qk', Q * (1.0 / math.sqrt(c)), K)
    probs = jax.nn.softmax(attn, axis=-1)
    wv_ = jnp.einsum('...qk,...kc->...qc', probs, V)                       # (B, Nh, S, c)
    wv_ = jnp.moveaxis(wv_, -3, -2).reshape(B, S, n_head * c)
    return wv_ @ wo.T + bo


def _init_linear(key, out_features, in_features, with_bias):
    """Deterministic init matching nn.Linear's Kaiming-uniform-style bounds."""
    kw, kb = jax.random.split(key)
    bound = 1.0 / math.sqrt(in_features)
    w = jax.random.uniform(kw, (out_features, in_features), jnp.float32, -bound, bound)
    if with_bias:
        b = jax.random.uniform(kb, (out_features,), jnp.float32, -bound, bound)
        return w, b
    return w, None


if __name__ == "__main__":
    # Module config: c_in=32, c=8, N_head=4, attn_dim=1, gated=False,
    # is_global=False, use_bias_for_embeddings=False.
    # TODO(synk): optional `bias` / `attention_mask` inputs and the gated /
    #             is_global variants are not implemented.
    B, S = 2, 8
    c_in, c, n_head = 32, 8, 4

    key = jax.random.PRNGKey(0)
    kx, kq, kk, kv, ko = jax.random.split(key, 5)

    x = jax.random.normal(kx, (B, S, c_in), jnp.float32)
    wq, _ = _init_linear(kq, c * n_head, c_in, with_bias=False)
    wk, _ = _init_linear(kk, c * n_head, c_in, with_bias=False)
    wv, _ = _init_linear(kv, c * n_head, c_in, with_bias=False)
    wo, bo = _init_linear(ko, c_in, c * n_head, with_bias=True)

    out = multi_head_attention(x, wq, wk, wv, wo, bo, c=c, n_head=n_head)
    out = jax.block_until_ready(out)

    ref = _reference(x, wq, wk, wv, wo, bo, c=c, n_head=n_head)
    assert out.shape == (B, S, c_in)
    # Tolerance sized for bf16 MXU operands (per review) + approx EUP reciprocal;
    # expected max abs error at these shapes is ~2-4e-3, so 2e-2 leaves margin.
    assert jnp.allclose(out, ref, atol=2e-2, rtol=2e-2), "mismatch vs reference"

    print("KERNEL_OK")
</pallas_src>

<mosaic_0001>
module attributes {stable_mosaic.version = 11 : i64} {
  func.func @_mha_kernel(%arg0: memref<16x32xbf16, #tpu.memory_space<vmem>>, %arg1: memref<4x32x8xbf16, #tpu.memory_space<vmem>>, %arg2: memref<4x32x8xbf16, #tpu.memory_space<vmem>>, %arg3: memref<4x32x8xbf16, #tpu.memory_space<vmem>>, %arg4: memref<4x8x32xbf16, #tpu.memory_space<vmem>>, %arg5: memref<1x32xf32, #tpu.memory_space<vmem>>, %arg6: memref<16x32xf32, #tpu.memory_space<vmem>>) attributes {dimension_semantics = [], scalar_prefetch = 0 : i64, scratch_operands = 0 : i64, tpu.core_type = #tpu.core_type<tc>} {
    %c0 = arith.constant 0 : index
    %c0_0 = arith.constant 0 : index
    %0 = vector.load %arg0[%c0, %c0_0] : memref<16x32xbf16, #tpu.memory_space<vmem>>, vector<16x32xbf16>
    %c0_1 = arith.constant 0 : index
    %c0_2 = arith.constant 0 : index
    %c0_3 = arith.constant 0 : index
    %1 = vector.load %arg1[%c0_1, %c0_2, %c0_3] : memref<4x32x8xbf16, #tpu.memory_space<vmem>>, vector<1x32x8xbf16>
    %2 = vector.shape_cast %1 : vector<1x32x8xbf16> to vector<32x8xbf16>
    %cst = arith.constant dense<0.000000e+00> : vector<16x8xf32>
    %3 = tpu.matmul %0, %2, %cst {dimension_numbers = #tpu.dot_dimension_numbers<[1], [0], [0], [1], [0, 0, 1, 1], [], []>} : vector<16x32xbf16>, vector<32x8xbf16>, vector<16x8xf32> -> vector<16x8xf32>
    %c0_4 = arith.constant 0 : index
    %c0_5 = arith.constant 0 : index
    %c0_6 = arith.constant 0 : index
    %4 = vector.load %arg2[%c0_4, %c0_5, %c0_6] : memref<4x32x8xbf16, #tpu.memory_space<vmem>>, vector<1x32x8xbf16>
    %5 = vector.shape_cast %4 : vector<1x32x8xbf16> to vector<32x8xbf16>
    %cst_7 = arith.constant dense<0.000000e+00> : vector<16x8xf32>
    %6 = tpu.matmul %0, %5, %cst_7 {dimension_numbers = #tpu.dot_dimension_numbers<[1], [0], [0], [1], [0, 0, 1, 1], [], []>} : vector<16x32xbf16>, vector<32x8xbf16>, vector<16x8xf32> -> vector<16x8xf32>
    %c0_8 = arith.constant 0 : index
    %c0_9 = arith.constant 0 : index
    %c0_10 = arith.constant 0 : index
    %7 = vector.load %arg3[%c0_8, %c0_9, %c0_10] : memref<4x32x8xbf16, #tpu.memory_space<vmem>>, vector<1x32x8xbf16>
    %8 = vector.shape_cast %7 : vector<1x32x8xbf16> to vector<32x8xbf16>
    %cst_11 = arith.constant dense<0.000000e+00> : vector<16x8xf32>
    %9 = tpu.matmul %0, %8, %cst_11 {dimension_numbers = #tpu.dot_dimension_numbers<[1], [0], [0], [1], [0, 0, 1, 1], [], []>} : vector<16x32xbf16>, vector<32x8xbf16>, vector<16x8xf32> -> vector<16x8xf32>
    %10 = vector.extract_strided_slice %3 {offsets = [0, 0], sizes = [8, 8], strides = [1, 1]} : vector<16x8xf32> to vector<8x8xf32>
    %11 = vector.extract_strided_slice %6 {offsets = [0, 0], sizes = [8, 8], strides = [1, 1]} : vector<16x8xf32> to vector<8x8xf32>
    %12 = vector.extract_strided_slice %9 {offsets = [0, 0], sizes = [8, 8], strides = [1, 1]} : vector<16x8xf32> to vector<8x8xf32>
    %cst_12 = arith.constant dense<0.000000e+00> : vector<8x8xf32>
    %13 = tpu.matmul %10, %11, %cst_12 {dimension_numbers = #tpu.dot_dimension_numbers<[1], [1], [0], [0], [0, 0, 1, 0], [], []>} : vector<8x8xf32>, vector<8x8xf32>, vector<8x8xf32> -> vector<8x8xf32>
    %cst_13 = arith.constant dense<0xFF800000> : vector<8xf32>
    %14 = vector.multi_reduction <maximumf>, %13, %cst_13 [1] : vector<8x8xf32> to vector<8xf32>
    %15 = vector.shape_cast %14 : vector<8xf32> to vector<8x1xf32>
    %16 = vector.broadcast %15 : vector<8x1xf32> to vector<8x8xf32>
    %17 = arith.subf %13, %16 : vector<8x8xf32>
    %18 = math.exp %17 : vector<8x8xf32>
    %cst_14 = arith.constant dense<0.000000e+00> : vector<8xf32>
    %19 = vector.multi_reduction <add>, %18, %cst_14 [1] : vector<8x8xf32> to vector<8xf32>
    %20 = vector.shape_cast %19 : vector<8xf32> to vector<8x1xf32>
    %21 = tpu.reciprocal %20 {approx = true} : vector<8x1xf32> -> vector<8x1xf32>
    %22 = vector.broadcast %21 : vector<8x1xf32> to vector<8x8xf32>
    %23 = arith.mulf %18, %22 : vector<8x8xf32>
    %cst_15 = arith.constant dense<0.000000e+00> : vector<8x8xf32>
    %24 = tpu.matmul %23, %12, %cst_15 {dimension_numbers = #tpu.dot_dimension_numbers<[1], [0], [0], [1], [0, 0, 1, 1], [], []>} : vector<8x8xf32>, vector<8x8xf32>, vector<8x8xf32> -> vector<8x8xf32>
    %25 = vector.extract_strided_slice %3 {offsets = [8, 0], sizes = [8, 8], strides = [1, 1]} : vector<16x8xf32> to vector<8x8xf32>
    %26 = vector.extract_strided_slice %6 {offsets = [8, 0], sizes = [8, 8], strides = [1, 1]} : vector<16x8xf32> to vector<8x8xf32>
    %27 = vector.extract_strided_slice %9 {offsets = [8, 0], sizes = [8, 8], strides = [1, 1]} : vector<16x8xf32> to vector<8x8xf32>
    %cst_16 = arith.constant dense<0.000000e+00> : vector<8x8xf32>
    %28 = tpu.matmul %25, %26, %cst_16 {dimension_numbers = #tpu.dot_dimension_numbers<[1], [1], [0], [0], [0, 0, 1, 0], [], []>} : vector<8x8xf32>, vector<8x8xf32>, vector<8x8xf32> -> vector<8x8xf32>
    %cst_17 = arith.constant dense<0xFF800000> : vector<8xf32>
    %29 = vector.multi_reduction <maximumf>, %28, %cst_17 [1] : vector<8x8xf32> to vector<8xf32>
    %30 = vector.shape_cast %29 : vector<8xf32> to vector<8x1xf32>
    %31 = vector.broadcast %30 : vector<8x1xf32> to vector<8x8xf32>
    %32 = arith.subf %28, %31 : vector<8x8xf32>
    %33 = math.exp %32 : vector<8x8xf32>
    %cst_18 = arith.constant dense<0.000000e+00> : vector<8xf32>
    %34 = vector.multi_reduction <add>, %33, %cst_18 [1] : vector<8x8xf32> to vector<8xf32>
    %35 = vector.shape_cast %34 : vector<8xf32> to vector<8x1xf32>
    %36 = tpu.reciprocal %35 {approx = true} : vector<8x1xf32> -> vector<8x1xf32>
    %37 = vector.broadcast %36 : vector<8x1xf32> to vector<8x8xf32>
    %38 = arith.mulf %33, %37 : vector<8x8xf32>
    %cst_19 = arith.constant dense<0.000000e+00> : vector<8x8xf32>
    %39 = tpu.matmul %38, %27, %cst_19 {dimension_numbers = #tpu.dot_dimension_numbers<[1], [0], [0], [1], [0, 0, 1, 1], [], []>} : vector<8x8xf32>, vector<8x8xf32>, vector<8x8xf32> -> vector<8x8xf32>
    %40 = tpu.concatenate %24, %39 in 0 : vector<8x8xf32>, vector<8x8xf32> -> vector<16x8xf32>
    %41 = arith.truncf %40 : vector<16x8xf32> to vector<16x8xbf16>
    %c0_20 = arith.constant 0 : index
    %c0_21 = arith.constant 0 : index
    %c0_22 = arith.constant 0 : index
    %42 = vector.load %arg4[%c0_20, %c0_21, %c0_22] : memref<4x8x32xbf16, #tpu.memory_space<vmem>>, vector<1x8x32xbf16>
    %43 = vector.shape_cast %42 : vector<1x8x32xbf16> to vector<8x32xbf16>
    %cst_23 = arith.constant dense<0.000000e+00> : vector<16x32xf32>
    %44 = tpu.matmul %41, %43, %cst_23 {dimension_numbers = #tpu.dot_dimension_numbers<[1], [0], [0], [1], [0, 0, 1, 1], [], []>} : vector<16x8xbf16>, vector<8x32xbf16>, vector<16x32xf32> -> vector<16x32xf32>
    %c1 = arith.constant 1 : index
    %c0_24 = arith.constant 0 : index
    %c0_25 = arith.constant 0 : index
    %45 = vector.load %arg1[%c1, %c0_24, %c0_25] : memref<4x32x8xbf16, #tpu.memory_space<vmem>>, vector<1x32x8xbf16>
    %46 = vector.shape_cast %45 : vector<1x32x8xbf16> to vector<32x8xbf16>
    %cst_26 = arith.constant dense<0.000000e+00> : vector<16x8xf32>
    %47 = tpu.matmul %0, %46, %cst_26 {dimension_numbers = #tpu.dot_dimension_numbers<[1], [0], [0], [1], [0, 0, 1, 1], [], []>} : vector<16x32xbf16>, vector<32x8xbf16>, vector<16x8xf32> -> vector<16x8xf32>
    %c1_27 = arith.constant 1 : index
    %c0_28 = arith.constant 0 : index
    %c0_29 = arith.constant 0 : index
    %48 = vector.load %arg2[%c1_27, %c0_28, %c0_29] : memref<4x32x8xbf16, #tpu.memory_space<vmem>>, vector<1x32x8xbf16>
    %49 = vector.shape_cast %48 : vector<1x32x8xbf16> to vector<32x8xbf16>
    %cst_30 = arith.constant dense<0.000000e+00> : vector<16x8xf32>
    %50 = tpu.matmul %0, %49, %cst_30 {dimension_numbers = #tpu.dot_dimension_numbers<[1], [0], [0], [1], [0, 0, 1, 1], [], []>} : vector<16x32xbf16>, vector<32x8xbf16>, vector<16x8xf32> -> vector<16x8xf32>
    %c1_31 = arith.constant 1 : index
    %c0_32 = arith.constant 0 : index
    %c0_33 = arith.constant 0 : index
    %51 = vector.load %arg3[%c1_31, %c0_32, %c0_33] : memref<4x32x8xbf16, #tpu.memory_space<vmem>>, vector<1x32x8xbf16>
    %52 = vector.shape_cast %51 : vector<1x32x8xbf16> to vector<32x8xbf16>
    %cst_34 = arith.constant dense<0.000000e+00> : vector<16x8xf32>
    %53 = tpu.matmul %0, %52, %cst_34 {dimension_numbers = #tpu.dot_dimension_numbers<[1], [0], [0], [1], [0, 0, 1, 1], [], []>} : vector<16x32xbf16>, vector<32x8xbf16>, vector<16x8xf32> -> vector<16x8xf32>
    %54 = vector.extract_strided_slice %47 {offsets = [0, 0], sizes = [8, 8], strides = [1, 1]} : vector<16x8xf32> to vector<8x8xf32>
    %55 = vector.extract_strided_slice %50 {offsets = [0, 0], sizes = [8, 8], strides = [1, 1]} : vector<16x8xf32> to vector<8x8xf32>
    %56 = vector.extract_strided_slice %53 {offsets = [0, 0], sizes = [8, 8], strides = [1, 1]} : vector<16x8xf32> to vector<8x8xf32>
    %cst_35 = arith.constant dense<0.000000e+00> : vector<8x8xf32>
    %57 = tpu.matmul %54, %55, %cst_35 {dimension_numbers = #tpu.dot_dimension_numbers<[1], [1], [0], [0], [0, 0, 1, 0], [], []>} : vector<8x8xf32>, vector<8x8xf32>, vector<8x8xf32> -> vector<8x8xf32>
    %cst_36 = arith.constant dense<0xFF800000> : vector<8xf32>
    %58 = vector.multi_reduction <maximumf>, %57, %cst_36 [1] : vector<8x8xf32> to vector<8xf32>
    %59 = vector.shape_cast %58 : vector<8xf32> to vector<8x1xf32>
    %60 = vector.broadcast %59 : vector<8x1xf32> to vector<8x8xf32>
    %61 = arith.subf %57, %60 : vector<8x8xf32>
    %62 = math.exp %61 : vector<8x8xf32>
    %cst_37 = arith.constant dense<0.000000e+00> : vector<8xf32>
    %63 = vector.multi_reduction <add>, %62, %cst_37 [1] : vector<8x8xf32> to vector<8xf32>
    %64 = vector.shape_cast %63 : vector<8xf32> to vector<8x1xf32>
    %65 = tpu.reciprocal %64 {approx = true} : vector<8x1xf32> -> vector<8x1xf32>
    %66 = vector.broadcast %65 : vector<8x1xf32> to vector<8x8xf32>
    %67 = arith.mulf %62, %66 : vector<8x8xf32>
    %cst_38 = arith.constant dense<0.000000e+00> : vector<8x8xf32>
    %68 = tpu.matmul %67, %56, %cst_38 {dimension_numbers = #tpu.dot_dimension_numbers<[1], [0], [0], [1], [0, 0, 1, 1], [], []>} : vector<8x8xf32>, vector<8x8xf32>, vector<8x8xf32> -> vector<8x8xf32>
    %69 = vector.extract_strided_slice %47 {offsets = [8, 0], sizes = [8, 8], strides = [1, 1]} : vector<16x8xf32> to vector<8x8xf32>
    %70 = vector.extract_strided_slice %50 {offsets = [8, 0], sizes = [8, 8], strides = [1, 1]} : vector<16x8xf32> to vector<8x8xf32>
    %71 = vector.extract_strided_slice %53 {offsets = [8, 0], sizes = [8, 8], strides = [1, 1]} : vector<16x8xf32> to vector<8x8xf32>
    %cst_39 = arith.constant dense<0.000000e+00> : vector<8x8xf32>
    %72 = tpu.matmul %69, %70, %cst_39 {dimension_numbers = #tpu.dot_dimension_numbers<[1], [1], [0], [0], [0, 0, 1, 0], [], []>} : vector<8x8xf32>, vector<8x8xf32>, vector<8x8xf32> -> vector<8x8xf32>
    %cst_40 = arith.constant dense<0xFF800000> : vector<8xf32>
    %73 = vector.multi_reduction <maximumf>, %72, %cst_40 [1] : vector<8x8xf32> to vector<8xf32>
    %74 = vector.shape_cast %73 : vector<8xf32> to vector<8x1xf32>
    %75 = vector.broadcast %74 : vector<8x1xf32> to vector<8x8xf32>
    %76 = arith.subf %72, %75 : vector<8x8xf32>
    %77 = math.exp %76 : vector<8x8xf32>
    %cst_41 = arith.constant dense<0.000000e+00> : vector<8xf32>
    %78 = vector.multi_reduction <add>, %77, %cst_41 [1] : vector<8x8xf32> to vector<8xf32>
    %79 = vector.shape_cast %78 : vector<8xf32> to vector<8x1xf32>
    %80 = tpu.reciprocal %79 {approx = true} : vector<8x1xf32> -> vector<8x1xf32>
    %81 = vector.broadcast %80 : vector<8x1xf32> to vector<8x8xf32>
    %82 = arith.mulf %77, %81 : vector<8x8xf32>
    %cst_42 = arith.constant dense<0.000000e+00> : vector<8x8xf32>
    %83 = tpu.matmul %82, %71, %cst_42 {dimension_numbers = #tpu.dot_dimension_numbers<[1], [0], [0], [1], [0, 0, 1, 1], [], []>} : vector<8x8xf32>, vector<8x8xf32>, vector<8x8xf32> -> vector<8x8xf32>
    %84 = tpu.concatenate %68, %83 in 0 : vector<8x8xf32>, vector<8x8xf32> -> vector<16x8xf32>
    %85 = arith.truncf %84 : vector<16x8xf32> to vector<16x8xbf16>
    %c1_43 = arith.constant 1 : index
    %c0_44 = arith.constant 0 : index
    %c0_45 = arith.constant 0 : index
    %86 = vector.load %arg4[%c1_43, %c0_44, %c0_45] : memref<4x8x32xbf16, #tpu.memory_space<vmem>>, vector<1x8x32xbf16>
    %87 = vector.shape_cast %86 : vector<1x8x32xbf16> to vector<8x32xbf16>
    %cst_46 = arith.constant dense<0.000000e+00> : vector<16x32xf32>
    %88 = tpu.matmul %85, %87, %cst_46 {dimension_numbers = #tpu.dot_dimension_numbers<[1], [0], [0], [1], [0, 0, 1, 1], [], []>} : vector<16x8xbf16>, vector<8x32xbf16>, vector<16x32xf32> -> vector<16x32xf32>
    %89 = arith.addf %44, %88 : vector<16x32xf32>
    %c2 = arith.constant 2 : index
    %c0_47 = arith.constant 0 : index
    %c0_48 = arith.constant 0 : index
    %90 = vector.load %arg1[%c2, %c0_47, %c0_48] : memref<4x32x8xbf16, #tpu.memory_space<vmem>>, vector<1x32x8xbf16>
    %91 = vector.shape_cast %90 : vector<1x32x8xbf16> to vector<32x8xbf16>
    %cst_49 = arith.constant dense<0.000000e+00> : vector<16x8xf32>
    %92 = tpu.matmul %0, %91, %cst_49 {dimension_numbers = #tpu.dot_dimension_numbers<[1], [0], [0], [1], [0, 0, 1, 1], [], []>} : vector<16x32xbf16>, vector<32x8xbf16>, vector<16x8xf32> -> vector<16x8xf32>
    %c2_50 = arith.constant 2 : index
    %c0_51 = arith.constant 0 : index
    %c0_52 = arith.constant 0 : index
    %93 = vector.load %arg2[%c2_50, %c0_51, %c0_52] : memref<4x32x8xbf16, #tpu.memory_space<vmem>>, vector<1x32x8xbf16>
    %94 = vector.shape_cast %93 : vector<1x32x8xbf16> to vector<32x8xbf16>
    %cst_53 = arith.constant dense<0.000000e+00> : vector<16x8xf32>
    %95 = tpu.matmul %0, %94, %cst_53 {dimension_numbers = #tpu.dot_dimension_numbers<[1], [0], [0], [1], [0, 0, 1, 1], [], []>} : vector<16x32xbf16>, vector<32x8xbf16>, vector<16x8xf32> -> vector<16x8xf32>
    %c2_54 = arith.constant 2 : index
    %c0_55 = arith.constant 0 : index
    %c0_56 = arith.constant 0 : index
    %96 = vector.load %arg3[%c2_54, %c0_55, %c0_56] : memref<4x32x8xbf16, #tpu.memory_space<vmem>>, vector<1x32x8xbf16>
    %97 = vector.shape_cast %96 : vector<1x32x8xbf16> to vector<32x8xbf16>
    %cst_57 = arith.constant dense<0.000000e+00> : vector<16x8xf32>
    %98 = tpu.matmul %0, %97, %cst_57 {dimension_numbers = #tpu.dot_dimension_numbers<[1], [0], [0], [1], [0, 0, 1, 1], [], []>} : vector<16x32xbf16>, vector<32x8xbf16>, vector<16x8xf32> -> vector<16x8xf32>
    %99 = vector.extract_strided_slice %92 {offsets = [0, 0], sizes = [8, 8], strides = [1, 1]} : vector<16x8xf32> to vector<8x8xf32>
    %100 = vector.extract_strided_slice %95 {offsets = [0, 0], sizes = [8, 8], strides = [1, 1]} : vector<16x8xf32> to vector<8x8xf32>
    %101 = vector.extract_strided_slice %98 {offsets = [0, 0], sizes = [8, 8], strides = [1, 1]} : vector<16x8xf32> to vector<8x8xf32>
    %cst_58 = arith.constant dense<0.000000e+00> : vector<8x8xf32>
    %102 = tpu.matmul %99, %100, %cst_58 {dimension_numbers = #tpu.dot_dimension_numbers<[1], [1], [0], [0], [0, 0, 1, 0], [], []>} : vector<8x8xf32>, vector<8x8xf32>, vector<8x8xf32> -> vector<8x8xf32>
    %cst_59 = arith.constant dense<0xFF800000> : vector<8xf32>
    %103 = vector.multi_reduction <maximumf>, %102, %cst_59 [1] : vector<8x8xf32> to vector<8xf32>
    %104 = vector.shape_cast %103 : vector<8xf32> to vector<8x1xf32>
    %105 = vector.broadcast %104 : vector<8x1xf32> to vector<8x8xf32>
    %106 = arith.subf %102, %105 : vector<8x8xf32>
    %107 = math.exp %106 : vector<8x8xf32>
    %cst_60 = arith.constant dense<0.000000e+00> : vector<8xf32>
    %108 = vector.multi_reduction <add>, %107, %cst_60 [1] : vector<8x8xf32> to vector<8xf32>
    %109 = vector.shape_cast %108 : vector<8xf32> to vector<8x1xf32>
    %110 = tpu.reciprocal %109 {approx = true} : vector<8x1xf32> -> vector<8x1xf32>
    %111 = vector.broadcast %110 : vector<8x1xf32> to vector<8x8xf32>
    %112 = arith.mulf %107, %111 : vector<8x8xf32>
    %cst_61 = arith.constant dense<0.000000e+00> : vector<8x8xf32>
    %113 = tpu.matmul %112, %101, %cst_61 {dimension_numbers = #tpu.dot_dimension_numbers<[1], [0], [0], [1], [0, 0, 1, 1], [], []>} : vector<8x8xf32>, vector<8x8xf32>, vector<8x8xf32> -> vector<8x8xf32>
    %114 = vector.extract_strided_slice %92 {offsets = [8, 0], sizes = [8, 8], strides = [1, 1]} : vector<16x8xf32> to vector<8x8xf32>
    %115 = vector.extract_strided_slice %95 {offsets = [8, 0], sizes = [8, 8], strides = [1, 1]} : vector<16x8xf32> to vector<8x8xf32>
    %116 = vector.extract_strided_slice %98 {offsets = [8, 0], sizes = [8, 8], strides = [1, 1]} : vector<16x8xf32> to vector<8x8xf32>
    %cst_62 = arith.constant dense<0.000000e+00> : vector<8x8xf32>
    %117 = tpu.matmul %114, %115, %cst_62 {dimension_numbers = #tpu.dot_dimension_numbers<[1], [1], [0], [0], [0, 0, 1, 0], [], []>} : vector<8x8xf32>, vector<8x8xf32>, vector<8x8xf32> -> vector<8x8xf32>
    %cst_63 = arith.constant dense<0xFF800000> : vector<8xf32>
    %118 = vector.multi_reduction <maximumf>, %117, %cst_63 [1] : vector<8x8xf32> to vector<8xf32>
    %119 = vector.shape_cast %118 : vector<8xf32> to vector<8x1xf32>
    %120 = vector.broadcast %119 : vector<8x1xf32> to vector<8x8xf32>
    %121 = arith.subf %117, %120 : vector<8x8xf32>
    %122 = math.exp %121 : vector<8x8xf32>
    %cst_64 = arith.constant dense<0.000000e+00> : vector<8xf32>
    %123 = vector.multi_reduction <add>, %122, %cst_64 [1] : vector<8x8xf32> to vector<8xf32>
    %124 = vector.shape_cast %123 : vector<8xf32> to vector<8x1xf32>
    %125 = tpu.reciprocal %124 {approx = true} : vector<8x1xf32> -> vector<8x1xf32>
    %126 = vector.broadcast %125 : vector<8x1xf32> to vector<8x8xf32>
    %127 = arith.mulf %122, %126 : vector<8x8xf32>
    %cst_65 = arith.constant dense<0.000000e+00> : vector<8x8xf32>
    %128 = tpu.matmul %127, %116, %cst_65 {dimension_numbers = #tpu.dot_dimension_numbers<[1], [0], [0], [1], [0, 0, 1, 1], [], []>} : vector<8x8xf32>, vector<8x8xf32>, vector<8x8xf32> -> vector<8x8xf32>
    %129 = tpu.concatenate %113, %128 in 0 : vector<8x8xf32>, vector<8x8xf32> -> vector<16x8xf32>
    %130 = arith.truncf %129 : vector<16x8xf32> to vector<16x8xbf16>
    %c2_66 = arith.constant 2 : index
    %c0_67 = arith.constant 0 : index
    %c0_68 = arith.constant 0 : index
    %131 = vector.load %arg4[%c2_66, %c0_67, %c0_68] : memref<4x8x32xbf16, #tpu.memory_space<vmem>>, vector<1x8x32xbf16>
    %132 = vector.shape_cast %131 : vector<1x8x32xbf16> to vector<8x32xbf16>
    %cst_69 = arith.constant dense<0.000000e+00> : vector<16x32xf32>
    %133 = tpu.matmul %130, %132, %cst_69 {dimension_numbers = #tpu.dot_dimension_numbers<[1], [0], [0], [1], [0, 0, 1, 1], [], []>} : vector<16x8xbf16>, vector<8x32xbf16>, vector<16x32xf32> -> vector<16x32xf32>
    %134 = arith.addf %89, %133 : vector<16x32xf32>
    %c3 = arith.constant 3 : index
    %c0_70 = arith.constant 0 : index
    %c0_71 = arith.constant 0 : index
    %135 = vector.load %arg1[%c3, %c0_70, %c0_71] : memref<4x32x8xbf16, #tpu.memory_space<vmem>>, vector<1x32x8xbf16>
    %136 = vector.shape_cast %135 : vector<1x32x8xbf16> to vector<32x8xbf16>
    %cst_72 = arith.constant dense<0.000000e+00> : vector<16x8xf32>
    %137 = tpu.matmul %0, %136, %cst_72 {dimension_numbers = #tpu.dot_dimension_numbers<[1], [0], [0], [1], [0, 0, 1, 1], [], []>} : vector<16x32xbf16>, vector<32x8xbf16>, vector<16x8xf32> -> vector<16x8xf32>
    %c3_73 = arith.constant 3 : index
    %c0_74 = arith.constant 0 : index
    %c0_75 = arith.constant 0 : index
    %138 = vector.load %arg2[%c3_73, %c0_74, %c0_75] : memref<4x32x8xbf16, #tpu.memory_space<vmem>>, vector<1x32x8xbf16>
    %139 = vector.shape_cast %138 : vector<1x32x8xbf16> to vector<32x8xbf16>
    %cst_76 = arith.constant dense<0.000000e+00> : vector<16x8xf32>
    %140 = tpu.matmul %0, %139, %cst_76 {dimension_numbers = #tpu.dot_dimension_numbers<[1], [0], [0], [1], [0, 0, 1, 1], [], []>} : vector<16x32xbf16>, vector<32x8xbf16>, vector<16x8xf32> -> vector<16x8xf32>
    %c3_77 = arith.constant 3 : index
    %c0_78 = arith.constant 0 : index
    %c0_79 = arith.constant 0 : index
    %141 = vector.load %arg3[%c3_77, %c0_78, %c0_79] : memref<4x32x8xbf16, #tpu.memory_space<vmem>>, vector<1x32x8xbf16>
    %142 = vector.shape_cast %141 : vector<1x32x8xbf16> to vector<32x8xbf16>
    %cst_80 = arith.constant dense<0.000000e+00> : vector<16x8xf32>
    %143 = tpu.matmul %0, %142, %cst_80 {dimension_numbers = #tpu.dot_dimension_numbers<[1], [0], [0], [1], [0, 0, 1, 1], [], []>} : vector<16x32xbf16>, vector<32x8xbf16>, vector<16x8xf32> -> vector<16x8xf32>
    %144 = vector.extract_strided_slice %137 {offsets = [0, 0], sizes = [8, 8], strides = [1, 1]} : vector<16x8xf32> to vector<8x8xf32>
    %145 = vector.extract_strided_slice %140 {offsets = [0, 0], sizes = [8, 8], strides = [1, 1]} : vector<16x8xf32> to vector<8x8xf32>
    %146 = vector.extract_strided_slice %143 {offsets = [0, 0], sizes = [8, 8], strides = [1, 1]} : vector<16x8xf32> to vector<8x8xf32>
    %cst_81 = arith.constant dense<0.000000e+00> : vector<8x8xf32>
    %147 = tpu.matmul %144, %145, %cst_81 {dimension_numbers = #tpu.dot_dimension_numbers<[1], [1], [0], [0], [0, 0, 1, 0], [], []>} : vector<8x8xf32>, vector<8x8xf32>, vector<8x8xf32> -> vector<8x8xf32>
    %cst_82 = arith.constant dense<0xFF800000> : vector<8xf32>
    %148 = vector.multi_reduction <maximumf>, %147, %cst_82 [1] : vector<8x8xf32> to vector<8xf32>
    %149 = vector.shape_cast %148 : vector<8xf32> to vector<8x1xf32>
    %150 = vector.broadcast %149 : vector<8x1xf32> to vector<8x8xf32>
    %151 = arith.subf %147, %150 : vector<8x8xf32>
    %152 = math.exp %151 : vector<8x8xf32>
    %cst_83 = arith.constant dense<0.000000e+00> : vector<8xf32>
    %153 = vector.multi_reduction <add>, %152, %cst_83 [1] : vector<8x8xf32> to vector<8xf32>
    %154 = vector.shape_cast %153 : vector<8xf32> to vector<8x1xf32>
    %155 = tpu.reciprocal %154 {approx = true} : vector<8x1xf32> -> vector<8x1xf32>
    %156 = vector.broadcast %155 : vector<8x1xf32> to vector<8x8xf32>
    %157 = arith.mulf %152, %156 : vector<8x8xf32>
    %cst_84 = arith.constant dense<0.000000e+00> : vector<8x8xf32>
    %158 = tpu.matmul %157, %146, %cst_84 {dimension_numbers = #tpu.dot_dimension_numbers<[1], [0], [0], [1], [0, 0, 1, 1], [], []>} : vector<8x8xf32>, vector<8x8xf32>, vector<8x8xf32> -> vector<8x8xf32>
    %159 = vector.extract_strided_slice %137 {offsets = [8, 0], sizes = [8, 8], strides = [1, 1]} : vector<16x8xf32> to vector<8x8xf32>
    %160 = vector.extract_strided_slice %140 {offsets = [8, 0], sizes = [8, 8], strides = [1, 1]} : vector<16x8xf32> to vector<8x8xf32>
    %161 = vector.extract_strided_slice %143 {offsets = [8, 0], sizes = [8, 8], strides = [1, 1]} : vector<16x8xf32> to vector<8x8xf32>
    %cst_85 = arith.constant dense<0.000000e+00> : vector<8x8xf32>
    %162 = tpu.matmul %159, %160, %cst_85 {dimension_numbers = #tpu.dot_dimension_numbers<[1], [1], [0], [0], [0, 0, 1, 0], [], []>} : vector<8x8xf32>, vector<8x8xf32>, vector<8x8xf32> -> vector<8x8xf32>
    %cst_86 = arith.constant dense<0xFF800000> : vector<8xf32>
    %163 = vector.multi_reduction <maximumf>, %162, %cst_86 [1] : vector<8x8xf32> to vector<8xf32>
    %164 = vector.shape_cast %163 : vector<8xf32> to vector<8x1xf32>
    %165 = vector.broadcast %164 : vector<8x1xf32> to vector<8x8xf32>
    %166 = arith.subf %162, %165 : vector<8x8xf32>
    %167 = math.exp %166 : vector<8x8xf32>
    %cst_87 = arith.constant dense<0.000000e+00> : vector<8xf32>
    %168 = vector.multi_reduction <add>, %167, %cst_87 [1] : vector<8x8xf32> to vector<8xf32>
    %169 = vector.shape_cast %168 : vector<8xf32> to vector<8x1xf32>
    %170 = tpu.reciprocal %169 {approx = true} : vector<8x1xf32> -> vector<8x1xf32>
    %171 = vector.broadcast %170 : vector<8x1xf32> to vector<8x8xf32>
    %172 = arith.mulf %167, %171 : vector<8x8xf32>
    %cst_88 = arith.constant dense<0.000000e+00> : vector<8x8xf32>
    %173 = tpu.matmul %172, %161, %cst_88 {dimension_numbers = #tpu.dot_dimension_numbers<[1], [0], [0], [1], [0, 0, 1, 1], [], []>} : vector<8x8xf32>, vector<8x8xf32>, vector<8x8xf32> -> vector<8x8xf32>
    %174 = tpu.concatenate %158, %173 in 0 : vector<8x8xf32>, vector<8x8xf32> -> vector<16x8xf32>
    %175 = arith.truncf %174 : vector<16x8xf32> to vector<16x8xbf16>
    %c3_89 = arith.constant 3 : index
    %c0_90 = arith.constant 0 : index
    %c0_91 = arith.constant 0 : index
    %176 = vector.load %arg4[%c3_89, %c0_90, %c0_91] : memref<4x8x32xbf16, #tpu.memory_space<vmem>>, vector<1x8x32xbf16>
    %177 = vector.shape_cast %176 : vector<1x8x32xbf16> to vector<8x32xbf16>
    %cst_92 = arith.constant dense<0.000000e+00> : vector<16x32xf32>
    %178 = tpu.matmul %175, %177, %cst_92 {dimension_numbers = #tpu.dot_dimension_numbers<[1], [0], [0], [1], [0, 0, 1, 1], [], []>} : vector<16x8xbf16>, vector<8x32xbf16>, vector<16x32xf32> -> vector<16x32xf32>
    %179 = arith.addf %134, %178 : vector<16x32xf32>
    %c0_93 = arith.constant 0 : index
    %c0_94 = arith.constant 0 : index
    %180 = vector.load %arg5[%c0_93, %c0_94] : memref<1x32xf32, #tpu.memory_space<vmem>>, vector<1x32xf32>
    %181 = vector.broadcast %180 : vector<1x32xf32> to vector<16x32xf32>
    %182 = arith.addf %179, %181 : vector<16x32xf32>
    %c0_95 = arith.constant 0 : index
    %c0_96 = arith.constant 0 : index
    %183 = vector.load %arg6[%c0_95, %c0_96] : memref<16x32xf32, #tpu.memory_space<vmem>>, vector<16x32xf32>
    tpu.vector_store %arg6[%c0_95, %c0_96], %182 {strides = array<i32>} : memref<16x32xf32, #tpu.memory_space<vmem>>, vector<16x32xf32>,
    return
  }
}

</mosaic_0001>

<llo_original>
// kernel: tpu_custom_call.1
$region0: #{tpu_custom_call.1}
  #allocation0 [shape = 'u32[]', space=smem, size = 0x4, offset = 0x4, fixed_abs, tag = 'smem constant byte address 0x4 - core index']
  #allocation1 [shape = 'u32[144,128]{1,0:T(1,128)}', space=vmem, size = 0x12000, scoped, tag = 'internal scratch']
  %s0 = inlined_call_operand.vmem [shape: bf16[16,32], index: 0, kind: input, shape index: {}]
  %s1 = inlined_call_operand.vmem [shape: bf16[4,32,8], index: 1, kind: input, shape index: {}]
  %s2 = inlined_call_operand.vmem [shape: bf16[4,32,8], index: 2, kind: input, shape index: {}]
  %s3 = inlined_call_operand.vmem [shape: bf16[4,32,8], index: 3, kind: input, shape index: {}]
  %s4 = inlined_call_operand.vmem [shape: bf16[4,8,32], index: 4, kind: input, shape index: {}]
  %s5 = inlined_call_operand.vmem [shape: f32[1,32], index: 5, kind: input, shape index: {}]
  %s6 = inlined_call_operand.hbm [shape: f32[16,32], index: 6, kind: output, shape index: {}]
  %s7 = sld [smem:[#allocation0]]
  $region34: #{tpu_custom_call.1} parent=0
    _
  %s9 = ssub.s32 1, %s7
  %s10 = scalar_select 0, %s9, %s7
  $region1: #{tpu_custom_call.1} parent=0
    #allocation2 [shape = 'u8[8192]{0}', space=vmem, size = 0x2000, scoped, tag = 'output window, operand 0, single buffered']
    #allocation3 [shape = 's32[1]{0}', space=sflag, size = 0x4, scoped, tag = 'scoped memory for tpu_custom_call.1']
    %11 = vsyncpa [#allocation3], 0
    // Predicated region
    $region2: #{tpu_custom_call.1} parent=1 // pred_check
      _
    $region3: #{tpu_custom_call.1} parent=1 // pred_check_branch
      %13 = sbr.rel (0) target = $region5
    $region4: #{tpu_custom_call.1} parent=1 // pred_region
      _
    $region5: #{tpu_custom_call.1} parent=1 // pred_fallthru
      _
    // Predicated region
    $region6: #{tpu_custom_call.1} parent=1 // pred_check
      _
    $region7: #{tpu_custom_call.1} parent=1 // pred_check_branch
      %15 = sbr.rel (0) target = $region9
    $region8: #{tpu_custom_call.1} parent=1 // pred_region
      _
    $region9: #{tpu_custom_call.1} parent=1 // pred_fallthru
      _
    // Predicated region
    $region10: #{tpu_custom_call.1} parent=1 // pred_check
      _
    $region11: #{tpu_custom_call.1} parent=1 // pred_check_branch
      %17 = sbr.rel (0) target = $region13
    $region12: #{tpu_custom_call.1} parent=1 // pred_region
      _
    $region13: #{tpu_custom_call.1} parent=1 // pred_fallthru
      _
    // Predicated region
    $region14: #{tpu_custom_call.1} parent=1 // pred_check
      _
    $region15: #{tpu_custom_call.1} parent=1 // pred_check_branch
      %19 = sbr.rel (0) target = $region17
    $region16: #{tpu_custom_call.1} parent=1 // pred_region
      _
    $region17: #{tpu_custom_call.1} parent=1 // pred_fallthru
      _
    // Predicated region
    $region18: #{tpu_custom_call.1} parent=1 // pred_check
      _
    $region19: #{tpu_custom_call.1} parent=1 // pred_check_branch
      %21 = sbr.rel (0) target = $region21
    $region20: #{tpu_custom_call.1} parent=1 // pred_region
      _
    $region21: #{tpu_custom_call.1} parent=1 // pred_fallthru
      _
    // Predicated region
    $region22: #{tpu_custom_call.1} parent=1 // pred_check
      _
    $region23: #{tpu_custom_call.1} parent=1 // pred_check_branch
      %23 = sbr.rel (0) target = $region25
    $region24: #{tpu_custom_call.1} parent=1 // pred_region
      _
    $region25: #{tpu_custom_call.1} parent=1 // pred_fallthru
      _
    %v25 = vld [vmem:[%s0] sm:$0xf]
    %v26 = vld [vmem:[%s0 + $0x4] sm:$0xf]
    %v27 = vld [vmem:[%s1] sm:$0xf]
    %v28 = vld [vmem:[%s1 + $0x4] sm:$0xf]
    %v29 = vld [vmem:[%s1 + $0x8] sm:$0xf]
    %v30 = vld [vmem:[%s1 + $0xc] sm:$0xf]
    %v33 = vunpack.c.l.b16 %v25
    %v34 = vunpack.c.l.b16 %v26
    %v35 = vpack.c.b16 %v34, %v33
    %v40 = vunpack.c.l.b16 %v27
    %v41 = vunpack.c.l.b16 %v28
    %v42 = vunpack.c.l.b16 %v29
    %v43 = vunpack.c.l.b16 %v30
    %v44 = vpack.c.b16 %v41, %v40
    %v45 = vpack.c.b16 %v43, %v42
    %vm48 = vcmask 261120
    %v50 = vsel %vm48, %v35, 0
    %52 = vmatprep.subr.bf16.mxu0 0
    %53 = vmatpush1.bf16.msra.mxu0 %v44
    %54 = vmatprep.subr.bf16.mxu0 0
    %55 = vmatpush1.bf16.msra.mxu0 %v45
    %56 = vmatprep.subr.bf16.mxu0 0
    %57 = vmatpush1.bf16.msra.mxu0 0
    %58 = vmatprep.subr.bf16.mxu0 0
    %59 = vmatpush1.bf16.msra.mxu0 0
    %60 = vmatprep.subr.bf16.mxu0 0
    %61 = vmatpush1.bf16.msra.mxu0 0
    %62 = vmatprep.subr.bf16.mxu0 0
    %63 = vmatpush1.bf16.msra.mxu0 0
    %64 = vmatprep.subr.bf16.mxu0 0
    %65 = vmatpush1.bf16.msra.mxu0 0
    %66 = vmatprep.subr.bf16.mxu0 0
    %67 = vmatpush1.bf16.msra.mxu0 0
    %68 = vmatprep.subr.bf16.mxu0 0
    %69 = vmatpush1.bf16.msra.mxu0 0
    %70 = vmatprep.subr.bf16.mxu0 0
    %71 = vmatpush1.bf16.msra.mxu0 0
    %72 = vmatprep.subr.bf16.mxu0 0
    %73 = vmatpush1.bf16.msra.mxu0 0
    %74 = vmatprep.subr.bf16.mxu0 0
    %75 = vmatpush1.bf16.msra.mxu0 0
    %76 = vmatprep.subr.bf16.mxu0 0
    %77 = vmatpush1.bf16.msra.mxu0 0
    %78 = vmatprep.subr.bf16.mxu0 0
    %79 = vmatpush1.bf16.msra.mxu0 0
    %80 = vmatprep.subr.bf16.mxu0 0
    %81 = vmatpush1.bf16.msra.mxu0 0
    %82 = vmatprep.subr.bf16.mxu0 0
    %83 = vmatpush1.bf16.msra.mxu0 0
    %84 = vmatprep.mubr.bf16.mxu0 0
    %85 = vmatmul.mubr.bf16.gmra.mrb[0].mxu0 %v50
    %v86 = vpop.f32.mrb[0].mxu0
    %v87 = vadd.f32 0.0, %v86
    %v88 = vpop.f32.mrb[0].mxu0
    %v89 = vpop.f32.mrb[0].mxu0
    %v90 = vadd.f32 0.0, %v89
    %v91 = vpop.f32.mrb[0].mxu0
    %92 = vdwg.mxu0
    %v93 = vld [vmem:[%s2] sm:$0xf]
    %v94 = vld [vmem:[%s2 + $0x4] sm:$0xf]
    %v95 = vld [vmem:[%s2 + $0x8] sm:$0xf]
    %v96 = vld [vmem:[%s2 + $0xc] sm:$0xf]
    %v101 = vunpack.c.l.b16 %v93
    %v102 = vunpack.c.l.b16 %v94
    %v103 = vunpack.c.l.b16 %v95
    %v104 = vunpack.c.l.b16 %v96
    %v105 = vpack.c.b16 %v102, %v101
    %v106 = vpack.c.b16 %v104, %v103
    %109 = vmatprep.subr.bf16.mxu0 0
    %110 = vmatpush1.bf16.msra.mxu0 %v105
    %111 = vmatprep.subr.bf16.mxu0 0
    %112 = vmatpush1.bf16.msra.mxu0 %v106
    %113 = vmatprep.subr.bf16.mxu0 0
    %114 = vmatpush1.bf16.msra.mxu0 0
    %115 = vmatprep.subr.bf16.mxu0 0
    %116 = vmatpush1.bf16.msra.mxu0 0
    %117 = vmatprep.subr.bf16.mxu0 0
    %118 = vmatpush1.bf16.msra.mxu0 0
    %119 = vmatprep.subr.bf16.mxu0 0
    %120 = vmatpush1.bf16.msra.mxu0 0
    %121 = vmatprep.subr.bf16.mxu0 0
    %122 = vmatpush1.bf16.msra.mxu0 0
    %123 = vmatprep.subr.bf16.mxu0 0
    %124 = vmatpush1.bf16.msra.mxu0 0
    %125 = vmatprep.subr.bf16.mxu0 0
    %126 = vmatpush1.bf16.msra.mxu0 0
    %127 = vmatprep.subr.bf16.mxu0 0
    %128 = vmatpush1.bf16.msra.mxu0 0
    %129 = vmatprep.subr.bf16.mxu0 0
    %130 = vmatpush1.bf16.msra.mxu0 0
    %131 = vmatprep.subr.bf16.mxu0 0
    %132 = vmatpush1.bf16.msra.mxu0 0
    %133 = vmatprep.subr.bf16.mxu0 0
    %134 = vmatpush1.bf16.msra.mxu0 0
    %135 = vmatprep.subr.bf16.mxu0 0
    %136 = vmatpush1.bf16.msra.mxu0 0
    %137 = vmatprep.subr.bf16.mxu0 0
    %138 = vmatpush1.bf16.msra.mxu0 0
    %139 = vmatprep.subr.bf16.mxu0 0
    %140 = vmatpush1.bf16.msra.mxu0 0
    %141 = vmatprep.mubr.bf16.mxu0 0
    %142 = vmatmul.mubr.bf16.gmra.mrb[0].mxu0 %v50
    %v143 = vpop.f32.mrb[0].mxu0
    %v144 = vadd.f32 0.0, %v143
    %v145 = vpop.f32.mrb[0].mxu0
    %v146 = vpop.f32.mrb[0].mxu0
    %v147 = vadd.f32 0.0, %v146
    %v148 = vpop.f32.mrb[0].mxu0
    %149 = vdwg.mxu0
    %v150 = vld [vmem:[%s3] sm:$0xf]
    %v151 = vld [vmem:[%s3 + $0x4] sm:$0xf]
    %v152 = vld [vmem:[%s3 + $0x8] sm:$0xf]
    %v153 = vld [vmem:[%s3 + $0xc] sm:$0xf]
    %v158 = vunpack.c.l.b16 %v150
    %v159 = vunpack.c.l.b16 %v151
    %v160 = vunpack.c.l.b16 %v152
    %v161 = vunpack.c.l.b16 %v153
    %v162 = vpack.c.b16 %v159, %v158
    %v163 = vpack.c.b16 %v161, %v160
    %166 = vmatprep.subr.bf16.mxu0 0
    %167 = vmatpush1.bf16.msra.mxu0 %v162
    %168 = vmatprep.subr.bf16.mxu0 0
    %169 = vmatpush1.bf16.msra.mxu0 %v163
    %170 = vmatprep.subr.bf16.mxu0 0
    %171 = vmatpush1.bf16.msra.mxu0 0
    %172 = vmatprep.subr.bf16.mxu0 0
    %173 = vmatpush1.bf16.msra.mxu0 0
    %174 = vmatprep.subr.bf16.mxu0 0
    %175 = vmatpush1.bf16.msra.mxu0 0
    %176 = vmatprep.subr.bf16.mxu0 0
    %177 = vmatpush1.bf16.msra.mxu0 0
    %178 = vmatprep.subr.bf16.mxu0 0
    %179 = vmatpush1.bf16.msra.mxu0 0
    %180 = vmatprep.subr.bf16.mxu0 0
    %181 = vmatpush1.bf16.msra.mxu0 0
    %182 = vmatprep.subr.bf16.mxu0 0
    %183 = vmatpush1.bf16.msra.mxu0 0
    %184 = vmatprep.subr.bf16.mxu0 0
    %185 = vmatpush1.bf16.msra.mxu0 0
    %186 = vmatprep.subr.bf16.mxu0 0
    %187 = vmatpush1.bf16.msra.mxu0 0
    %188 = vmatprep.subr.bf16.mxu0 0
    %189 = vmatpush1.bf16.msra.mxu0 0
    %190 = vmatprep.subr.bf16.mxu0 0
    %191 = vmatpush1.bf16.msra.mxu0 0
    %192 = vmatprep.subr.bf16.mxu0 0
    %193 = vmatpush1.bf16.msra.mxu0 0
    %194 = vmatprep.subr.bf16.mxu0 0
    %195 = vmatpush1.bf16.msra.mxu0 0
    %196 = vmatprep.subr.bf16.mxu0 0
    %197 = vmatpush1.bf16.msra.mxu0 0
    %198 = vmatprep.mubr.bf16.mxu0 0
    %199 = vmatmul.mubr.bf16.gmra.mrb[0].mxu0 %v50
    %v200 = vpop.f32.mrb[0].mxu0
    %v201 = vadd.f32 0.0, %v200
    %v202 = vpop.f32.mrb[0].mxu0
    %v203 = vpop.f32.mrb[0].mxu0
    %v204 = vadd.f32 0.0, %v203
    %v205 = vpop.f32.mrb[0].mxu0
    %206 = vdwg.mxu0
    %vm207 = vcmask 64512
    %v209 = vsel %vm207, %v87, 0
    %v212 = vsel %vm207, %v144, 0
    %214 = vmatprep.subr.mxu0 0.0
    %215 = vmatpush1.xpose.msra.mxu0 %v212
    %216 = vmatprep.subr.mxu0 0.0
    %217 = vmatpush1.xpose.msra.mxu0 0.0
    %218 = vmatprep.subr.mxu0 0.0
    %219 = vmatpush1.xpose.msra.mxu0 0.0
    %220 = vmatprep.subr.mxu0 0.0
    %221 = vmatpush1.xpose.msra.mxu0 0.0
    %222 = vmatprep.subr.mxu0 0.0
    %223 = vmatpush1.xpose.msra.mxu0 0.0
    %224 = vmatprep.subr.mxu0 0.0
    %225 = vmatpush1.xpose.msra.mxu0 0.0
    %226 = vmatprep.subr.mxu0 0.0
    %227 = vmatpush1.xpose.msra.mxu0 0.0
    %228 = vmatprep.subr.mxu0 0.0
    %229 = vmatpush1.xpose.msra.mxu0 0.0
    %230 = vmatprep.subr.mxu0 0.0
    %231 = vmatpush1.xpose.msra.mxu0 0.0
    %232 = vmatprep.subr.mxu0 0.0
    %233 = vmatpush1.xpose.msra.mxu0 0.0
    %234 = vmatprep.subr.mxu0 0.0
    %235 = vmatpush1.xpose.msra.mxu0 0.0
    %236 = vmatprep.subr.mxu0 0.0
    %237 = vmatpush1.xpose.msra.mxu0 0.0
    %238 = vmatprep.subr.mxu0 0.0
    %239 = vmatpush1.xpose.msra.mxu0 0.0
    %240 = vmatprep.subr.mxu0 0.0
    %241 = vmatpush1.xpose.msra.mxu0 0.0
    %242 = vmatprep.subr.mxu0 0.0
    %243 = vmatpush1.xpose.msra.mxu0 0.0
    %244 = vmatprep.subr.mxu0 0.0
    %245 = vmatpush1.xpose.msra.mxu0 0.0
    %246 = vmatprep.subr.mxu0 0.0
    %247 = vmatpush1.xpose.msra.mxu0 0.0
    %248 = vmatprep.subr.mxu0 0.0
    %249 = vmatpush1.xpose.msra.mxu0 0.0
    %250 = vmatprep.subr.mxu0 0.0
    %251 = vmatpush1.xpose.msra.mxu0 0.0
    %252 = vmatprep.subr.mxu0 0.0
    %253 = vmatpush1.xpose.msra.mxu0 0.0
    %254 = vmatprep.subr.mxu0 0.0
    %255 = vmatpush1.xpose.msra.mxu0 0.0
    %256 = vmatprep.subr.mxu0 0.0
    %257 = vmatpush1.xpose.msra.mxu0 0.0
    %258 = vmatprep.subr.mxu0 0.0
    %259 = vmatpush1.xpose.msra.mxu0 0.0
    %260 = vmatprep.subr.mxu0 0.0
    %261 = vmatpush1.xpose.msra.mxu0 0.0
    %262 = vmatprep.subr.mxu0 0.0
    %263 = vmatpush1.xpose.msra.mxu0 0.0
    %264 = vmatprep.subr.mxu0 0.0
    %265 = vmatpush1.xpose.msra.mxu0 0.0
    %266 = vmatprep.subr.mxu0 0.0
    %267 = vmatpush1.xpose.msra.mxu0 0.0
    %268 = vmatprep.subr.mxu0 0.0
    %269 = vmatpush1.xpose.msra.mxu0 0.0
    %270 = vmatprep.subr.mxu0 0.0
    %271 = vmatpush1.xpose.msra.mxu0 0.0
    %272 = vmatprep.subr.mxu0 0.0
    %273 = vmatpush1.xpose.msra.mxu0 0.0
    %274 = vmatprep.subr.mxu0 0.0
    %275 = vmatpush1.xpose.msra.mxu0 0.0
    %276 = vmatprep.subr.mxu0 0.0
    %277 = vmatpush1.xpose.msra.mxu0 0.0
    %278 = vmatprep.mubr.f32.mxu0 0.0
    %279 = vmatmul.mubr.f32.gmra.mrb[0].mxu0 %v209
    %v280 = vpop.f32.mrb[0].mxu0
    %v281 = vadd.f32 0.0, %v280
    %v282 = vpop.f32.mrb[0].mxu0
    %283 = vdwg.mxu0
    %v284 = vsel %vm207, %v281, -inf
    %285 = vmax.xlane.f32.xlu0 %v284
    %v286 = vpop.xlane.xlu0 %285
    %v287 = vsub.f32 %v281, %v286
    %v288 = vmul.f32 %v287, 1.442695
    %v289 = vpow.pop %v288
    %v290 = vsel %vm207, %v289, 0.0
    %291 = vadd.xlane.f32.xlu0 %v290
    %v292 = vpop.xlane.xlu0 %291
    %v293 = vrcp.pop %v292
    %v294 = vmul.f32 %v289, %v293
    %v296 = vsel %vm207, %v294, 0
    %298 = vmatprep.subr.mxu0 0.0
    %299 = vmatpush1.msra.mxu0 %v201
    %300 = vmatprep.subr.mxu0 0.0
    %301 = vmatpush1.msra.mxu0 0.0
    %302 = vmatprep.subr.mxu0 0.0
    %303 = vmatpush1.msra.mxu0 0.0
    %304 = vmatprep.subr.mxu0 0.0
    %305 = vmatpush1.msra.mxu0 0.0
    %306 = vmatprep.subr.mxu0 0.0
    %307 = vmatpush1.msra.mxu0 0.0
    %308 = vmatprep.subr.mxu0 0.0
    %309 = vmatpush1.msra.mxu0 0.0
    %310 = vmatprep.subr.mxu0 0.0
    %311 = vmatpush1.msra.mxu0 0.0
    %312 = vmatprep.subr.mxu0 0.0
    %313 = vmatpush1.msra.mxu0 0.0
    %314 = vmatprep.subr.mxu0 0.0
    %315 = vmatpush1.msra.mxu0 0.0
    %316 = vmatprep.subr.mxu0 0.0
    %317 = vmatpush1.msra.mxu0 0.0
    %318 = vmatprep.subr.mxu0 0.0
    %319 = vmatpush1.msra.mxu0 0.0
    %320 = vmatprep.subr.mxu0 0.0
    %321 = vmatpush1.msra.mxu0 0.0
    %322 = vmatprep.subr.mxu0 0.0
    %323 = vmatpush1.msra.mxu0 0.0
    %324 = vmatprep.subr.mxu0 0.0
    %325 = vmatpush1.msra.mxu0 0.0
    %326 = vmatprep.subr.mxu0 0.0
    %327 = vmatpush1.msra.mxu0 0.0
    %328 = vmatprep.subr.mxu0 0.0
    %329 = vmatpush1.msra.mxu0 0.0
    %330 = vmatprep.subr.mxu0 0.0
    %331 = vmatpush1.msra.mxu0 0.0
    %332 = vmatprep.subr.mxu0 0.0
    %333 = vmatpush1.msra.mxu0 0.0
    %334 = vmatprep.subr.mxu0 0.0
    %335 = vmatpush1.msra.mxu0 0.0
    %336 = vmatprep.subr.mxu0 0.0
    %337 = vmatpush1.msra.mxu0 0.0
    %338 = vmatprep.subr.mxu0 0.0
    %339 = vmatpush1.msra.mxu0 0.0
    %340 = vmatprep.subr.mxu0 0.0
    %341 = vmatpush1.msra.mxu0 0.0
    %342 = vmatprep.subr.mxu0 0.0
    %343 = vmatpush1.msra.mxu0 0.0
    %344 = vmatprep.subr.mxu0 0.0
    %345 = vmatpush1.msra.mxu0 0.0
    %346 = vmatprep.subr.mxu0 0.0
    %347 = vmatpush1.msra.mxu0 0.0
    %348 = vmatprep.subr.mxu0 0.0
    %349 = vmatpush1.msra.mxu0 0.0
    %350 = vmatprep.subr.mxu0 0.0
    %351 = vmatpush1.msra.mxu0 0.0
    %352 = vmatprep.subr.mxu0 0.0
    %353 = vmatpush1.msra.mxu0 0.0
    %354 = vmatprep.subr.mxu0 0.0
    %355 = vmatpush1.msra.mxu0 0.0
    %356 = vmatprep.subr.mxu0 0.0
    %357 = vmatpush1.msra.mxu0 0.0
    %358 = vmatprep.subr.mxu0 0.0
    %359 = vmatpush1.msra.mxu0 0.0
    %360 = vmatprep.subr.mxu0 0.0
    %361 = vmatpush1.msra.mxu0 0.0
    %362 = vmatprep.mubr.f32.mxu0 0.0
    %363 = vmatmul.mubr.f32.gmra.mrb[0].mxu0 %v296
    %v364 = vpop.f32.mrb[0].mxu0
    %v365 = vadd.f32 0.0, %v364
    %v366 = vpop.f32.mrb[0].mxu0
    %367 = vdwg.mxu0
    %v369 = vsel %vm207, %v90, 0
    %v372 = vsel %vm207, %v147, 0
    %374 = vmatprep.subr.mxu0 0.0
    %375 = vmatpush1.xpose.msra.mxu0 %v372
    %376 = vmatprep.subr.mxu0 0.0
    %377 = vmatpush1.xpose.msra.mxu0 0.0
    %378 = vmatprep.subr.mxu0 0.0
    %379 = vmatpush1.xpose.msra.mxu0 0.0
    %380 = vmatprep.subr.mxu0 0.0
    %381 = vmatpush1.xpose.msra.mxu0 0.0
    %382 = vmatprep.subr.mxu0 0.0
    %383 = vmatpush1.xpose.msra.mxu0 0.0
    %384 = vmatprep.subr.mxu0 0.0
    %385 = vmatpush1.xpose.msra.mxu0 0.0
    %386 = vmatprep.subr.mxu0 0.0
    %387 = vmatpush1.xpose.msra.mxu0 0.0
    %388 = vmatprep.subr.mxu0 0.0
    %389 = vmatpush1.xpose.msra.mxu0 0.0
    %390 = vmatprep.subr.mxu0 0.0
    %391 = vmatpush1.xpose.msra.mxu0 0.0
    %392 = vmatprep.subr.mxu0 0.0
    %393 = vmatpush1.xpose.msra.mxu0 0.0
    %394 = vmatprep.subr.mxu0 0.0
    %395 = vmatpush1.xpose.msra.mxu0 0.0
    %396 = vmatprep.subr.mxu0 0.0
    %397 = vmatpush1.xpose.msra.mxu0 0.0
    %398 = vmatprep.subr.mxu0 0.0
    %399 = vmatpush1.xpose.msra.mxu0 0.0
    %400 = vmatprep.subr.mxu0 0.0
    %401 = vmatpush1.xpose.msra.mxu0 0.0
    %402 = vmatprep.subr.mxu0 0.0
    %403 = vmatpush1.xpose.msra.mxu0 0.0
    %404 = vmatprep.subr.mxu0 0.0
    %405 = vmatpush1.xpose.msra.mxu0 0.0
    %406 = vmatprep.subr.mxu0 0.0
    %407 = vmatpush1.xpose.msra.mxu0 0.0
    %408 = vmatprep.subr.mxu0 0.0
    %409 = vmatpush1.xpose.msra.mxu0 0.0
    %410 = vmatprep.subr.mxu0 0.0
    %411 = vmatpush1.xpose.msra.mxu0 0.0
    %412 = vmatprep.subr.mxu0 0.0
    %413 = vmatpush1.xpose.msra.mxu0 0.0
    %414 = vmatprep.subr.mxu0 0.0
    %415 = vmatpush1.xpose.msra.mxu0 0.0
    %416 = vmatprep.subr.mxu0 0.0
    %417 = vmatpush1.xpose.msra.mxu0 0.0
    %418 = vmatprep.subr.mxu0 0.0
    %419 = vmatpush1.xpose.msra.mxu0 0.0
    %420 = vmatprep.subr.mxu0 0.0
    %421 = vmatpush1.xpose.msra.mxu0 0.0
    %422 = vmatprep.subr.mxu0 0.0
    %423 = vmatpush1.xpose.msra.mxu0 0.0
    %424 = vmatprep.subr.mxu0 0.0
    %425 = vmatpush1.xpose.msra.mxu0 0.0
    %426 = vmatprep.subr.mxu0 0.0
    %427 = vmatpush1.xpose.msra.mxu0 0.0
    %428 = vmatprep.subr.mxu0 0.0
    %429 = vmatpush1.xpose.msra.mxu0 0.0
    %430 = vmatprep.subr.mxu0 0.0
    %431 = vmatpush1.xpose.msra.mxu0 0.0
    %432 = vmatprep.subr.mxu0 0.0
    %433 = vmatpush1.xpose.msra.mxu0 0.0
    %434 = vmatprep.subr.mxu0 0.0
    %435 = vmatpush1.xpose.msra.mxu0 0.0
    %436 = vmatprep.subr.mxu0 0.0
    %437 = vmatpush1.xpose.msra.mxu0 0.0
    %438 = vmatprep.mubr.f32.mxu0 0.0
    %439 = vmatmul.mubr.f32.gmra.mrb[0].mxu0 %v369
    %v440 = vpop.f32.mrb[0].mxu0
    %v441 = vadd.f32 0.0, %v440
    %v442 = vpop.f32.mrb[0].mxu0
    %443 = vdwg.mxu0
    %v444 = vsel %vm207, %v441, -inf
    %445 = vmax.xlane.f32.xlu0 %v444
    %v446 = vpop.xlane.xlu0 %445
    %v447 = vsub.f32 %v441, %v446
    %v448 = vmul.f32 %v447, 1.442695
    %v449 = vpow.pop %v448
    %v450 = vsel %vm207, %v449, 0.0
    %451 = vadd.xlane.f32.xlu0 %v450
    %v452 = vpop.xlane.xlu0 %451
    %v453 = vrcp.pop %v452
    %v454 = vmul.f32 %v449, %v453
    %v456 = vsel %vm207, %v454, 0
    %458 = vmatprep.subr.mxu0 0.0
    %459 = vmatpush1.msra.mxu0 %v204
    %460 = vmatprep.subr.mxu0 0.0
    %461 = vmatpush1.msra.mxu0 0.0
    %462 = vmatprep.subr.mxu0 0.0
    %463 = vmatpush1.msra.mxu0 0.0
    %464 = vmatprep.subr.mxu0 0.0
    %465 = vmatpush1.msra.mxu0 0.0
    %466 = vmatprep.subr.mxu0 0.0
    %467 = vmatpush1.msra.mxu0 0.0
    %468 = vmatprep.subr.mxu0 0.0
    %469 = vmatpush1.msra.mxu0 0.0
    %470 = vmatprep.subr.mxu0 0.0
    %471 = vmatpush1.msra.mxu0 0.0
    %472 = vmatprep.subr.mxu0 0.0
    %473 = vmatpush1.msra.mxu0 0.0
    %474 = vmatprep.subr.mxu0 0.0
    %475 = vmatpush1.msra.mxu0 0.0
    %476 = vmatprep.subr.mxu0 0.0
    %477 = vmatpush1.msra.mxu0 0.0
    %478 = vmatprep.subr.mxu0 0.0
    %479 = vmatpush1.msra.mxu0 0.0
    %480 = vmatprep.subr.mxu0 0.0
    %481 = vmatpush1.msra.mxu0 0.0
    %482 = vmatprep.subr.mxu0 0.0
    %483 = vmatpush1.msra.mxu0 0.0
    %484 = vmatprep.subr.mxu0 0.0
    %485 = vmatpush1.msra.mxu0 0.0
    %486 = vmatprep.subr.mxu0 0.0
    %487 = vmatpush1.msra.mxu0 0.0
    %488 = vmatprep.subr.mxu0 0.0
    %489 = vmatpush1.msra.mxu0 0.0
    %490 = vmatprep.subr.mxu0 0.0
    %491 = vmatpush1.msra.mxu0 0.0
    %492 = vmatprep.subr.mxu0 0.0
    %493 = vmatpush1.msra.mxu0 0.0
    %494 = vmatprep.subr.mxu0 0.0
    %495 = vmatpush1.msra.mxu0 0.0
    %496 = vmatprep.subr.mxu0 0.0
    %497 = vmatpush1.msra.mxu0 0.0
    %498 = vmatprep.subr.mxu0 0.0
    %499 = vmatpush1.msra.mxu0 0.0
    %500 = vmatprep.subr.mxu0 0.0
    %501 = vmatpush1.msra.mxu0 0.0
    %502 = vmatprep.subr.mxu0 0.0
    %503 = vmatpush1.msra.mxu0 0.0
    %504 = vmatprep.subr.mxu0 0.0
    %505 = vmatpush1.msra.mxu0 0.0
    %506 = vmatprep.subr.mxu0 0.0
    %507 = vmatpush1.msra.mxu0 0.0
    %508 = vmatprep.subr.mxu0 0.0
    %509 = vmatpush1.msra.mxu0 0.0
    %510 = vmatprep.subr.mxu0 0.0
    %511 = vmatpush1.msra.mxu0 0.0
    %512 = vmatprep.subr.mxu0 0.0
    %513 = vmatpush1.msra.mxu0 0.0
    %514 = vmatprep.subr.mxu0 0.0
    %515 = vmatpush1.msra.mxu0 0.0
    %516 = vmatprep.subr.mxu0 0.0
    %517 = vmatpush1.msra.mxu0 0.0
    %518 = vmatprep.subr.mxu0 0.0
    %519 = vmatpush1.msra.mxu0 0.0
    %520 = vmatprep.subr.mxu0 0.0
    %521 = vmatpush1.msra.mxu0 0.0
    %522 = vmatprep.mubr.f32.mxu0 0.0
    %523 = vmatmul.mubr.f32.gmra.mrb[0].mxu0 %v456
    %v524 = vpop.f32.mrb[0].mxu0
    %v525 = vadd.f32 0.0, %v524
    %v526 = vpop.f32.mrb[0].mxu0
    %527 = vdwg.mxu0
    %v528 = vpack.c.bf16 %v525, %v365
    %v529 = vld [vmem:[%s4] sm:$0xf]
    %s530 = scalar_lea.vmem %s1, 16
    %v531 = vld [vmem:[%s530] sm:$0xf]
    %v532 = vld [vmem:[%s530 + $0x4] sm:$0xf]
    %v533 = vld [vmem:[%s530 + $0x8] sm:$0xf]
    %v534 = vld [vmem:[%s530 + $0xc] sm:$0xf]
    %v539 = vunpack.c.l.b16 %v531
    %v540 = vunpack.c.l.b16 %v532
    %v541 = vunpack.c.l.b16 %v533
    %v542 = vunpack.c.l.b16 %v534
    %v543 = vpack.c.b16 %v540, %v539
    %v544 = vpack.c.b16 %v542, %v541
    %547 = vmatprep.subr.bf16.mxu0 0
    %548 = vmatpush1.bf16.msra.mxu0 %v543
    %549 = vmatprep.subr.bf16.mxu0 0
    %550 = vmatpush1.bf16.msra.mxu0 %v544
    %551 = vmatprep.subr.bf16.mxu0 0
    %552 = vmatpush1.bf16.msra.mxu0 0
    %553 = vmatprep.subr.bf16.mxu0 0
    %554 = vmatpush1.bf16.msra.mxu0 0
    %555 = vmatprep.subr.bf16.mxu0 0
    %556 = vmatpush1.bf16.msra.mxu0 0
    %557 = vmatprep.subr.bf16.mxu0 0
    %558 = vmatpush1.bf16.msra.mxu0 0
    %559 = vmatprep.subr.bf16.mxu0 0
    %560 = vmatpush1.bf16.msra.mxu0 0
    %561 = vmatprep.subr.bf16.mxu0 0
    %562 = vmatpush1.bf16.msra.mxu0 0
    %563 = vmatprep.subr.bf16.mxu0 0
    %564 = vmatpush1.bf16.msra.mxu0 0
    %565 = vmatprep.subr.bf16.mxu0 0
    %566 = vmatpush1.bf16.msra.mxu0 0
    %567 = vmatprep.subr.bf16.mxu0 0
    %568 = vmatpush1.bf16.msra.mxu0 0
    %569 = vmatprep.subr.bf16.mxu0 0
    %570 = vmatpush1.bf16.msra.mxu0 0
    %571 = vmatprep.subr.bf16.mxu0 0
    %572 = vmatpush1.bf16.msra.mxu0 0
    %573 = vmatprep.subr.bf16.mxu0 0
    %574 = vmatpush1.bf16.msra.mxu0 0
    %575 = vmatprep.subr.bf16.mxu0 0
    %576 = vmatpush1.bf16.msra.mxu0 0
    %577 = vmatprep.subr.bf16.mxu0 0
    %578 = vmatpush1.bf16.msra.mxu0 0
    %579 = vmatprep.mubr.bf16.mxu0 0
    %580 = vmatmul.mubr.bf16.gmra.mrb[0].mxu0 %v50
    %v581 = vpop.f32.mrb[0].mxu0
    %v582 = vadd.f32 0.0, %v581
    %v583 = vpop.f32.mrb[0].mxu0
    %v584 = vpop.f32.mrb[0].mxu0
    %v585 = vadd.f32 0.0, %v584
    %v586 = vpop.f32.mrb[0].mxu0
    %587 = vdwg.mxu0
    %s588 = scalar_lea.vmem %s2, 16
    %v589 = vld [vmem:[%s588] sm:$0xf]
    %v590 = vld [vmem:[%s588 + $0x4] sm:$0xf]
    %v591 = vld [vmem:[%s588 + $0x8] sm:$0xf]
    %v592 = vld [vmem:[%s588 + $0xc] sm:$0xf]
    %v597 = vunpack.c.l.b16 %v589
    %v598 = vunpack.c.l.b16 %v590
    %v599 = vunpack.c.l.b16 %v591
    %v600 = vunpack.c.l.b16 %v592
    %v601 = vpack.c.b16 %v598, %v597
    %v602 = vpack.c.b16 %v600, %v599
    %605 = vmatprep.subr.bf16.mxu0 0
    %606 = vmatpush1.bf16.msra.mxu0 %v601
    %607 = vmatprep.subr.bf16.mxu0 0
    %608 = vmatpush1.bf16.msra.mxu0 %v602
    %609 = vmatprep.subr.bf16.mxu0 0
    %610 = vmatpush1.bf16.msra.mxu0 0
    %611 = vmatprep.subr.bf16.mxu0 0
    %612 = vmatpush1.bf16.msra.mxu0 0
    %613 = vmatprep.subr.bf16.mxu0 0
    %614 = vmatpush1.bf16.msra.mxu0 0
    %615 = vmatprep.subr.bf16.mxu0 0
    %616 = vmatpush1.bf16.msra.mxu0 0
    %617 = vmatprep.subr.bf16.mxu0 0
    %618 = vmatpush1.bf16.msra.mxu0 0
    %619 = vmatprep.subr.bf16.mxu0 0
    %620 = vmatpush1.bf16.msra.mxu0 0
    %621 = vmatprep.subr.bf16.mxu0 0
    %622 = vmatpush1.bf16.msra.mxu0 0
    %623 = vmatprep.subr.bf16.mxu0 0
    %624 = vmatpush1.bf16.msra.mxu0 0
    %625 = vmatprep.subr.bf16.mxu0 0
    %626 = vmatpush1.bf16.msra.mxu0 0
    %627 = vmatprep.subr.bf16.mxu0 0
    %628 = vmatpush1.bf16.msra.mxu0 0
    %629 = vmatprep.subr.bf16.mxu0 0
    %630 = vmatpush1.bf16.msra.mxu0 0
    %631 = vmatprep.subr.bf16.mxu0 0
    %632 = vmatpush1.bf16.msra.mxu0 0
    %633 = vmatprep.subr.bf16.mxu0 0
    %634 = vmatpush1.bf16.msra.mxu0 0
    %635 = vmatprep.subr.bf16.mxu0 0
    %636 = vmatpush1.bf16.msra.mxu0 0
    %637 = vmatprep.mubr.bf16.mxu0 0
    %638 = vmatmul.mubr.bf16.gmra.mrb[0].mxu0 %v50
    %v639 = vpop.f32.mrb[0].mxu0
    %v640 = vadd.f32 0.0, %v639
    %v641 = vpop.f32.mrb[0].mxu0
    %v642 = vpop.f32.mrb[0].mxu0
    %v643 = vadd.f32 0.0, %v642
    %v644 = vpop.f32.mrb[0].mxu0
    %645 = vdwg.mxu0
    %s646 = scalar_lea.vmem %s3, 16
    %v647 = vld [vmem:[%s646] sm:$0xf]
    %v648 = vld [vmem:[%s646 + $0x4] sm:$0xf]
    %v649 = vld [vmem:[%s646 + $0x8] sm:$0xf]
    %v650 = vld [vmem:[%s646 + $0xc] sm:$0xf]
    %v655 = vunpack.c.l.b16 %v647
    %v656 = vunpack.c.l.b16 %v648
    %v657 = vunpack.c.l.b16 %v649
    %v658 = vunpack.c.l.b16 %v650
    %v659 = vpack.c.b16 %v656, %v655
    %v660 = vpack.c.b16 %v658, %v657
    %663 = vmatprep.subr.bf16.mxu0 0
    %664 = vmatpush1.bf16.msra.mxu0 %v659
    %665 = vmatprep.subr.bf16.mxu0 0
    %666 = vmatpush1.bf16.msra.mxu0 %v660
    %667 = vmatprep.subr.bf16.mxu0 0
    %668 = vmatpush1.bf16.msra.mxu0 0
    %669 = vmatprep.subr.bf16.mxu0 0
    %670 = vmatpush1.bf16.msra.mxu0 0
    %671 = vmatprep.subr.bf16.mxu0 0
    %672 = vmatpush1.bf16.msra.mxu0 0
    %673 = vmatprep.subr.bf16.mxu0 0
    %674 = vmatpush1.bf16.msra.mxu0 0
    %675 = vmatprep.subr.bf16.mxu0 0
    %676 = vmatpush1.bf16.msra.mxu0 0
    %677 = vmatprep.subr.bf16.mxu0 0
    %678 = vmatpush1.bf16.msra.mxu0 0
    %679 = vmatprep.subr.bf16.mxu0 0
    %680 = vmatpush1.bf16.msra.mxu0 0
    %681 = vmatprep.subr.bf16.mxu0 0
    %682 = vmatpush1.bf16.msra.mxu0 0
    %683 = vmatprep.subr.bf16.mxu0 0
    %684 = vmatpush1.bf16.msra.mxu0 0
    %685 = vmatprep.subr.bf16.mxu0 0
    %686 = vmatpush1.bf16.msra.mxu0 0
    %687 = vmatprep.subr.bf16.mxu0 0
    %688 = vmatpush1.bf16.msra.mxu0 0
    %689 = vmatprep.subr.bf16.mxu0 0
    %690 = vmatpush1.bf16.msra.mxu0 0
    %691 = vmatprep.subr.bf16.mxu0 0
    %692 = vmatpush1.bf16.msra.mxu0 0
    %693 = vmatprep.subr.bf16.mxu0 0
    %694 = vmatpush1.bf16.msra.mxu0 0
    %695 = vmatprep.mubr.bf16.mxu0 0
    %696 = vmatmul.mubr.bf16.gmra.mrb[0].mxu0 %v50
    %v697 = vpop.f32.mrb[0].mxu0
    %v698 = vadd.f32 0.0, %v697
    %v699 = vpop.f32.mrb[0].mxu0
    %v700 = vpop.f32.mrb[0].mxu0
    %v701 = vadd.f32 0.0, %v700
    %v702 = vpop.f32.mrb[0].mxu0
    %703 = vdwg.mxu0
    %v705 = vsel %vm207, %v582, 0
    %v708 = vsel %vm207, %v640, 0
    %710 = vmatprep.subr.mxu0 0.0
    %711 = vmatpush1.xpose.msra.mxu0 %v708
    %712 = vmatprep.subr.mxu0 0.0
    %713 = vmatpush1.xpose.msra.mxu0 0.0
    %714 = vmatprep.subr.mxu0 0.0
    %715 = vmatpush1.xpose.msra.mxu0 0.0
    %716 = vmatprep.subr.mxu0 0.0
    %717 = vmatpush1.xpose.msra.mxu0 0.0
    %718 = vmatprep.subr.mxu0 0.0
    %719 = vmatpush1.xpose.msra.mxu0 0.0
    %720 = vmatprep.subr.mxu0 0.0
    %721 = vmatpush1.xpose.msra.mxu0 0.0
    %722 = vmatprep.subr.mxu0 0.0
    %723 = vmatpush1.xpose.msra.mxu0 0.0
    %724 = vmatprep.subr.mxu0 0.0
    %725 = vmatpush1.xpose.msra.mxu0 0.0
    %726 = vmatprep.subr.mxu0 0.0
    %727 = vmatpush1.xpose.msra.mxu0 0.0
    %728 = vmatprep.subr.mxu0 0.0
    %729 = vmatpush1.xpose.msra.mxu0 0.0
    %730 = vmatprep.subr.mxu0 0.0
    %731 = vmatpush1.xpose.msra.mxu0 0.0
    %732 = vmatprep.subr.mxu0 0.0
    %733 = vmatpush1.xpose.msra.mxu0 0.0
    %734 = vmatprep.subr.mxu0 0.0
    %735 = vmatpush1.xpose.msra.mxu0 0.0
    %736 = vmatprep.subr.mxu0 0.0
    %737 = vmatpush1.xpose.msra.mxu0 0.0
    %738 = vmatprep.subr.mxu0 0.0
    %739 = vmatpush1.xpose.msra.mxu0 0.0
    %740 = vmatprep.subr.mxu0 0.0
    %741 = vmatpush1.xpose.msra.mxu0 0.0
    %742 = vmatprep.subr.mxu0 0.0
    %743 = vmatpush1.xpose.msra.mxu0 0.0
    %744 = vmatprep.subr.mxu0 0.0
    %745 = vmatpush1.xpose.msra.mxu0 0.0
    %746 = vmatprep.subr.mxu0 0.0
    %747 = vmatpush1.xpose.msra.mxu0 0.0
    %748 = vmatprep.subr.mxu0 0.0
    %749 = vmatpush1.xpose.msra.mxu0 0.0
    %750 = vmatprep.subr.mxu0 0.0
    %751 = vmatpush1.xpose.msra.mxu0 0.0
    %752 = vmatprep.subr.mxu0 0.0
    %753 = vmatpush1.xpose.msra.mxu0 0.0
    %754 = vmatprep.subr.mxu0 0.0
    %755 = vmatpush1.xpose.msra.mxu0 0.0
    %756 = vmatprep.subr.mxu0 0.0
    %757 = vmatpush1.xpose.msra.mxu0 0.0
    %758 = vmatprep.subr.mxu0 0.0
    %759 = vmatpush1.xpose.msra.mxu0 0.0
    %760 = vmatprep.subr.mxu0 0.0
    %761 = vmatpush1.xpose.msra.mxu0 0.0
    %762 = vmatprep.subr.mxu0 0.0
    %763 = vmatpush1.xpose.msra.mxu0 0.0
    %764 = vmatprep.subr.mxu0 0.0
    %765 = vmatpush1.xpose.msra.mxu0 0.0
    %766 = vmatprep.subr.mxu0 0.0
    %767 = vmatpush1.xpose.msra.mxu0 0.0
    %768 = vmatprep.subr.mxu0 0.0
    %769 = vmatpush1.xpose.msra.mxu0 0.0
    %770 = vmatprep.subr.mxu0 0.0
    %771 = vmatpush1.xpose.msra.mxu0 0.0
    %772 = vmatprep.subr.mxu0 0.0
    %773 = vmatpush1.xpose.msra.mxu0 0.0
    %774 = vmatprep.mubr.f32.mxu0 0.0
    %775 = vmatmul.mubr.f32.gmra.mrb[0].mxu0 %v705
    %v776 = vpop.f32.mrb[0].mxu0
    %v777 = vadd.f32 0.0, %v776
    %v778 = vpop.f32.mrb[0].mxu0
    %779 = vdwg.mxu0
    %v780 = vsel %vm207, %v777, -inf
    %781 = vmax.xlane.f32.xlu0 %v780
    %v782 = vpop.xlane.xlu0 %781
    %v783 = vsub.f32 %v777, %v782
    %v784 = vmul.f32 %v783, 1.442695
    %v785 = vpow.pop %v784
    %v786 = vsel %vm207, %v785, 0.0
    %787 = vadd.xlane.f32.xlu0 %v786
    %v788 = vpop.xlane.xlu0 %787
    %v789 = vrcp.pop %v788
    %v790 = vmul.f32 %v785, %v789
    %v792 = vsel %vm207, %v790, 0
    %794 = vmatprep.subr.mxu0 0.0
    %795 = vmatpush1.msra.mxu0 %v698
    %796 = vmatprep.subr.mxu0 0.0
    %797 = vmatpush1.msra.mxu0 0.0
    %798 = vmatprep.subr.mxu0 0.0
    %799 = vmatpush1.msra.mxu0 0.0
    %800 = vmatprep.subr.mxu0 0.0
    %801 = vmatpush1.msra.mxu0 0.0
    %802 = vmatprep.subr.mxu0 0.0
    %803 = vmatpush1.msra.mxu0 0.0
    %804 = vmatprep.subr.mxu0 0.0
    %805 = vmatpush1.msra.mxu0 0.0
    %806 = vmatprep.subr.mxu0 0.0
    %807 = vmatpush1.msra.mxu0 0.0
    %808 = vmatprep.subr.mxu0 0.0
    %809 = vmatpush1.msra.mxu0 0.0
    %810 = vmatprep.subr.mxu0 0.0
    %811 = vmatpush1.msra.mxu0 0.0
    %812 = vmatprep.subr.mxu0 0.0
    %813 = vmatpush1.msra.mxu0 0.0
    %814 = vmatprep.subr.mxu0 0.0
    %815 = vmatpush1.msra.mxu0 0.0
    %816 = vmatprep.subr.mxu0 0.0
    %817 = vmatpush1.msra.mxu0 0.0
    %818 = vmatprep.subr.mxu0 0.0
    %819 = vmatpush1.msra.mxu0 0.0
    %820 = vmatprep.subr.mxu0 0.0
    %821 = vmatpush1.msra.mxu0 0.0
    %822 = vmatprep.subr.mxu0 0.0
    %823 = vmatpush1.msra.mxu0 0.0
    %824 = vmatprep.subr.mxu0 0.0
    %825 = vmatpush1.msra.mxu0 0.0
    %826 = vmatprep.subr.mxu0 0.0
    %827 = vmatpush1.msra.mxu0 0.0
    %828 = vmatprep.subr.mxu0 0.0
    %829 = vmatpush1.msra.mxu0 0.0
    %830 = vmatprep.subr.mxu0 0.0
    %831 = vmatpush1.msra.mxu0 0.0
    %832 = vmatprep.subr.mxu0 0.0
    %833 = vmatpush1.msra.mxu0 0.0
    %834 = vmatprep.subr.mxu0 0.0
    %835 = vmatpush1.msra.mxu0 0.0
    %836 = vmatprep.subr.mxu0 0.0
    %837 = vmatpush1.msra.mxu0 0.0
    %838 = vmatprep.subr.mxu0 0.0
    %839 = vmatpush1.msra.mxu0 0.0
    %840 = vmatprep.subr.mxu0 0.0
    %841 = vmatpush1.msra.mxu0 0.0
    %842 = vmatprep.subr.mxu0 0.0
    %843 = vmatpush1.msra.mxu0 0.0
    %844 = vmatprep.subr.mxu0 0.0
    %845 = vmatpush1.msra.mxu0 0.0
    %846 = vmatprep.subr.mxu0 0.0
    %847 = vmatpush1.msra.mxu0 0.0
    %848 = vmatprep.subr.mxu0 0.0
    %849 = vmatpush1.msra.mxu0 0.0
    %850 = vmatprep.subr.mxu0 0.0
    %851 = vmatpush1.msra.mxu0 0.0
    %852 = vmatprep.subr.mxu0 0.0
    %853 = vmatpush1.msra.mxu0 0.0
    %854 = vmatprep.subr.mxu0 0.0
    %855 = vmatpush1.msra.mxu0 0.0
    %856 = vmatprep.subr.mxu0 0.0
    %857 = vmatpush1.msra.mxu0 0.0
    %858 = vmatprep.mubr.f32.mxu0 0.0
    %859 = vmatmul.mubr.f32.gmra.mrb[0].mxu0 %v792
    %v860 = vpop.f32.mrb[0].mxu0
    %v861 = vadd.f32 0.0, %v860
    %v862 = vpop.f32.mrb[0].mxu0
    %863 = vdwg.mxu0
    %v865 = vsel %vm207, %v585, 0
    %v868 = vsel %vm207, %v643, 0
    %870 = vmatprep.subr.mxu0 0.0
    %871 = vmatpush1.xpose.msra.mxu0 %v868
    %872 = vmatprep.subr.mxu0 0.0
    %873 = vmatpush1.xpose.msra.mxu0 0.0
    %874 = vmatprep.subr.mxu0 0.0
    %875 = vmatpush1.xpose.msra.mxu0 0.0
    %876 = vmatprep.subr.mxu0 0.0
    %877 = vmatpush1.xpose.msra.mxu0 0.0
    %878 = vmatprep.subr.mxu0 0.0
    %879 = vmatpush1.xpose.msra.mxu0 0.0
    %880 = vmatprep.subr.mxu0 0.0
    %881 = vmatpush1.xpose.msra.mxu0 0.0
    %882 = vmatprep.subr.mxu0 0.0
    %883 = vmatpush1.xpose.msra.mxu0 0.0
    %884 = vmatprep.subr.mxu0 0.0
    %885 = vmatpush1.xpose.msra.mxu0 0.0
    %886 = vmatprep.subr.mxu0 0.0
    %887 = vmatpush1.xpose.msra.mxu0 0.0
    %888 = vmatprep.subr.mxu0 0.0
    %889 = vmatpush1.xpose.msra.mxu0 0.0
    %890 = vmatprep.subr.mxu0 0.0
    %891 = vmatpush1.xpose.msra.mxu0 0.0
    %892 = vmatprep.subr.mxu0 0.0
    %893 = vmatpush1.xpose.msra.mxu0 0.0
    %894 = vmatprep.subr.mxu0 0.0
    %895 = vmatpush1.xpose.msra.mxu0 0.0
    %896 = vmatprep.subr.mxu0 0.0
    %897 = vmatpush1.xpose.msra.mxu0 0.0
    %898 = vmatprep.subr.mxu0 0.0
    %899 = vmatpush1.xpose.msra.mxu0 0.0
    %900 = vmatprep.subr.mxu0 0.0
    %901 = vmatpush1.xpose.msra.mxu0 0.0
    %902 = vmatprep.subr.mxu0 0.0
    %903 = vmatpush1.xpose.msra.mxu0 0.0
    %904 = vmatprep.subr.mxu0 0.0
    %905 = vmatpush1.xpose.msra.mxu0 0.0
    %906 = vmatprep.subr.mxu0 0.0
    %907 = vmatpush1.xpose.msra.mxu0 0.0
    %908 = vmatprep.subr.mxu0 0.0
    %909 = vmatpush1.xpose.msra.mxu0 0.0
    %910 = vmatprep.subr.mxu0 0.0
    %911 = vmatpush1.xpose.msra.mxu0 0.0
    %912 = vmatprep.subr.mxu0 0.0
    %913 = vmatpush1.xpose.msra.mxu0 0.0
    %914 = vmatprep.subr.mxu0 0.0
    %915 = vmatpush1.xpose.msra.mxu0 0.0
    %916 = vmatprep.subr.mxu0 0.0
    %917 = vmatpush1.xpose.msra.mxu0 0.0
    %918 = vmatprep.subr.mxu0 0.0
    %919 = vmatpush1.xpose.msra.mxu0 0.0
    %920 = vmatprep.subr.mxu0 0.0
    %921 = vmatpush1.xpose.msra.mxu0 0.0
    %922 = vmatprep.subr.mxu0 0.0
    %923 = vmatpush1.xpose.msra.mxu0 0.0
    %924 = vmatprep.subr.mxu0 0.0
    %925 = vmatpush1.xpose.msra.mxu0 0.0
    %926 = vmatprep.subr.mxu0 0.0
    %927 = vmatpush1.xpose.msra.mxu0 0.0
    %928 = vmatprep.subr.mxu0 0.0
    %929 = vmatpush1.xpose.msra.mxu0 0.0
    %930 = vmatprep.subr.mxu0 0.0
    %931 = vmatpush1.xpose.msra.mxu0 0.0
    %932 = vmatprep.subr.mxu0 0.0
    %933 = vmatpush1.xpose.msra.mxu0 0.0
    %934 = vmatprep.mubr.f32.mxu0 0.0
    %935 = vmatmul.mubr.f32.gmra.mrb[0].mxu0 %v865
    %v936 = vpop.f32.mrb[0].mxu0
    %v937 = vadd.f32 0.0, %v936
    %v938 = vpop.f32.mrb[0].mxu0
    %939 = vdwg.mxu0
    %v940 = vsel %vm207, %v937, -inf
    %941 = vmax.xlane.f32.xlu0 %v940
    %v942 = vpop.xlane.xlu0 %941
    %v943 = vsub.f32 %v937, %v942
    %v944 = vmul.f32 %v943, 1.442695
    %v945 = vpow.pop %v944
    %v946 = vsel %vm207, %v945, 0.0
    %947 = vadd.xlane.f32.xlu0 %v946
    %v948 = vpop.xlane.xlu0 %947
    %v949 = vrcp.pop %v948
    %v950 = vmul.f32 %v945, %v949
    %v952 = vsel %vm207, %v950, 0
    %954 = vmatprep.subr.mxu0 0.0
    %955 = vmatpush1.msra.mxu0 %v701
    %956 = vmatprep.subr.mxu0 0.0
    %957 = vmatpush1.msra.mxu0 0.0
    %958 = vmatprep.subr.mxu0 0.0
    %959 = vmatpush1.msra.mxu0 0.0
    %960 = vmatprep.subr.mxu0 0.0
    %961 = vmatpush1.msra.mxu0 0.0
    %962 = vmatprep.subr.mxu0 0.0
    %963 = vmatpush1.msra.mxu0 0.0
    %964 = vmatprep.subr.mxu0 0.0
    %965 = vmatpush1.msra.mxu0 0.0
    %966 = vmatprep.subr.mxu0 0.0
    %967 = vmatpush1.msra.mxu0 0.0
    %968 = vmatprep.subr.mxu0 0.0
    %969 = vmatpush1.msra.mxu0 0.0
    %970 = vmatprep.subr.mxu0 0.0
    %971 = vmatpush1.msra.mxu0 0.0
    %972 = vmatprep.subr.mxu0 0.0
    %973 = vmatpush1.msra.mxu0 0.0
    %974 = vmatprep.subr.mxu0 0.0
    %975 = vmatpush1.msra.mxu0 0.0
    %976 = vmatprep.subr.mxu0 0.0
    %977 = vmatpush1.msra.mxu0 0.0
    %978 = vmatprep.subr.mxu0 0.0
    %979 = vmatpush1.msra.mxu0 0.0
    %980 = vmatprep.subr.mxu0 0.0
    %981 = vmatpush1.msra.mxu0 0.0
    %982 = vmatprep.subr.mxu0 0.0
    %983 = vmatpush1.msra.mxu0 0.0
    %984 = vmatprep.subr.mxu0 0.0
    %985 = vmatpush1.msra.mxu0 0.0
    %986 = vmatprep.subr.mxu0 0.0
    %987 = vmatpush1.msra.mxu0 0.0
    %988 = vmatprep.subr.mxu0 0.0
    %989 = vmatpush1.msra.mxu0 0.0
    %990 = vmatprep.subr.mxu0 0.0
    %991 = vmatpush1.msra.mxu0 0.0
    %992 = vmatprep.subr.mxu0 0.0
    %993 = vmatpush1.msra.mxu0 0.0
    %994 = vmatprep.subr.mxu0 0.0
    %995 = vmatpush1.msra.mxu0 0.0
    %996 = vmatprep.subr.mxu0 0.0
    %997 = vmatpush1.msra.mxu0 0.0
    %998 = vmatprep.subr.mxu0 0.0
    %999 = vmatpush1.msra.mxu0 0.0
    %1000 = vmatprep.subr.mxu0 0.0
    %1001 = vmatpush1.msra.mxu0 0.0
    %1002 = vmatprep.subr.mxu0 0.0
    %1003 = vmatpush1.msra.mxu0 0.0
    %1004 = vmatprep.subr.mxu0 0.0
    %1005 = vmatpush1.msra.mxu0 0.0
    %1006 = vmatprep.subr.mxu0 0.0
    %1007 = vmatpush1.msra.mxu0 0.0
    %1008 = vmatprep.subr.mxu0 0.0
    %1009 = vmatpush1.msra.mxu0 0.0
    %1010 = vmatprep.subr.mxu0 0.0
    %1011 = vmatpush1.msra.mxu0 0.0
    %1012 = vmatprep.subr.mxu0 0.0
    %1013 = vmatpush1.msra.mxu0 0.0
    %1014 = vmatprep.subr.mxu0 0.0
    %1015 = vmatpush1.msra.mxu0 0.0
    %1016 = vmatprep.subr.mxu0 0.0
    %1017 = vmatpush1.msra.mxu0 0.0
    %1018 = vmatprep.mubr.f32.mxu0 0.0
    %1019 = vmatmul.mubr.f32.gmra.mrb[0].mxu0 %v952
    %v1020 = vpop.f32.mrb[0].mxu0
    %v1021 = vadd.f32 0.0, %v1020
    %v1022 = vpop.f32.mrb[0].mxu0
    %1023 = vdwg.mxu0
    %v1024 = vpack.c.bf16 %v1021, %v861
    %s1025 = scalar_lea.vmem %s4, 4
    %v1026 = vld [vmem:[%s1025] sm:$0xf]
    %v1028 = vsel %vm207, %v1024, 0
    %vm1030 = vcmask 1043456
    %v1032 = vsel %vm1030, %v1026, 0
    %1034 = vmatprep.subr.bf16.mxu0 0
    %1035 = vmatpush1.bf16.msra.mxu0 %v1032
    %1036 = vmatprep.subr.bf16.mxu0 0
    %1037 = vmatpush1.bf16.msra.mxu0 0
    %1038 = vmatprep.subr.bf16.mxu0 0
    %1039 = vmatpush1.bf16.msra.mxu0 0
    %1040 = vmatprep.subr.bf16.mxu0 0
    %1041 = vmatpush1.bf16.msra.mxu0 0
    %1042 = vmatprep.subr.bf16.mxu0 0
    %1043 = vmatpush1.bf16.msra.mxu0 0
    %1044 = vmatprep.subr.bf16.mxu0 0
    %1045 = vmatpush1.bf16.msra.mxu0 0
    %1046 = vmatprep.subr.bf16.mxu0 0
    %1047 = vmatpush1.bf16.msra.mxu0 0
    %1048 = vmatprep.subr.bf16.mxu0 0
    %1049 = vmatpush1.bf16.msra.mxu0 0
    %1050 = vmatprep.subr.bf16.mxu0 0
    %1051 = vmatpush1.bf16.msra.mxu0 0
    %1052 = vmatprep.subr.bf16.mxu0 0
    %1053 = vmatpush1.bf16.msra.mxu0 0
    %1054 = vmatprep.subr.bf16.mxu0 0
    %1055 = vmatpush1.bf16.msra.mxu0 0
    %1056 = vmatprep.subr.bf16.mxu0 0
    %1057 = vmatpush1.bf16.msra.mxu0 0
    %1058 = vmatprep.subr.bf16.mxu0 0
    %1059 = vmatpush1.bf16.msra.mxu0 0
    %1060 = vmatprep.subr.bf16.mxu0 0
    %1061 = vmatpush1.bf16.msra.mxu0 0
    %1062 = vmatprep.subr.bf16.mxu0 0
    %1063 = vmatpush1.bf16.msra.mxu0 0
    %1064 = vmatprep.subr.bf16.mxu0 0
    %1065 = vmatpush1.bf16.msra.mxu0 0
    %1066 = vmatprep.mubr.bf16.mxu0 0
    %1067 = vmatmul.mubr.bf16.gmra.mrb[0].mxu0 %v1028
    %v1068 = vpop.f32.mrb[0].mxu0
    %v1069 = vadd.f32 0.0, %v1068
    %v1070 = vpop.f32.mrb[0].mxu0
    %v1071 = vpop.f32.mrb[0].mxu0
    %v1072 = vadd.f32 0.0, %v1071
    %v1073 = vpop.f32.mrb[0].mxu0
    %1074 = vdwg.mxu0
    %v1076 = vsel %vm207, %v528, 0
    %v1079 = vsel %vm1030, %v529, 0
    %1081 = vmatprep.subr.bf16.mxu0 0
    %1082 = vmatpush1.bf16.msra.mxu0 %v1079
    %1083 = vmatprep.subr.bf16.mxu0 0
    %1084 = vmatpush1.bf16.msra.mxu0 0
    %1085 = vmatprep.subr.bf16.mxu0 0
    %1086 = vmatpush1.bf16.msra.mxu0 0
    %1087 = vmatprep.subr.bf16.mxu0 0
    %1088 = vmatpush1.bf16.msra.mxu0 0
    %1089 = vmatprep.subr.bf16.mxu0 0
    %1090 = vmatpush1.bf16.msra.mxu0 0
    %1091 = vmatprep.subr.bf16.mxu0 0
    %1092 = vmatpush1.bf16.msra.mxu0 0
    %1093 = vmatprep.subr.bf16.mxu0 0
    %1094 = vmatpush1.bf16.msra.mxu0 0
    %1095 = vmatprep.subr.bf16.mxu0 0
    %1096 = vmatpush1.bf16.msra.mxu0 0
    %1097 = vmatprep.subr.bf16.mxu0 0
    %1098 = vmatpush1.bf16.msra.mxu0 0
    %1099 = vmatprep.subr.bf16.mxu0 0
    %1100 = vmatpush1.bf16.msra.mxu0 0
    %1101 = vmatprep.subr.bf16.mxu0 0
    %1102 = vmatpush1.bf16.msra.mxu0 0
    %1103 = vmatprep.subr.bf16.mxu0 0
    %1104 = vmatpush1.bf16.msra.mxu0 0
    %1105 = vmatprep.subr.bf16.mxu0 0
    %1106 = vmatpush1.bf16.msra.mxu0 0
    %1107 = vmatprep.subr.bf16.mxu0 0
    %1108 = vmatpush1.bf16.msra.mxu0 0
    %1109 = vmatprep.subr.bf16.mxu0 0
    %1110 = vmatpush1.bf16.msra.mxu0 0
    %1111 = vmatprep.subr.bf16.mxu0 0
    %1112 = vmatpush1.bf16.msra.mxu0 0
    %1113 = vmatprep.mubr.bf16.mxu0 0
    %1114 = vmatmul.mubr.bf16.gmra.mrb[0].mxu0 %v1076
    %v1115 = vpop.f32.mrb[0].mxu0
    %v1116 = vadd.f32 %v1069, %v1115
    %v1117 = vpop.f32.mrb[0].mxu0
    %v1118 = vpop.f32.mrb[0].mxu0
    %v1119 = vadd.f32 %v1072, %v1118
    %v1120 = vpop.f32.mrb[0].mxu0
    %1121 = vdwg.mxu0
    %s1122 = scalar_lea.vmem %s1, 32
    %v1123 = vld [vmem:[%s1122] sm:$0xf]
    %v1124 = vld [vmem:[%s1122 + $0x4] sm:$0xf]
    %v1125 = vld [vmem:[%s1122 + $0x8] sm:$0xf]
    %v1126 = vld [vmem:[%s1122 + $0xc] sm:$0xf]
    %v1131 = vunpack.c.l.b16 %v1123
    %v1132 = vunpack.c.l.b16 %v1124
    %v1133 = vunpack.c.l.b16 %v1125
    %v1134 = vunpack.c.l.b16 %v1126
    %v1135 = vpack.c.b16 %v1132, %v1131
    %v1136 = vpack.c.b16 %v1134, %v1133
    %1139 = vmatprep.subr.bf16.mxu0 0
    %1140 = vmatpush1.bf16.msra.mxu0 %v1135
    %1141 = vmatprep.subr.bf16.mxu0 0
    %1142 = vmatpush1.bf16.msra.mxu0 %v1136
    %1143 = vmatprep.subr.bf16.mxu0 0
    %1144 = vmatpush1.bf16.msra.mxu0 0
    %1145 = vmatprep.subr.bf16.mxu0 0
    %1146 = vmatpush1.bf16.msra.mxu0 0
    %1147 = vmatprep.subr.bf16.mxu0 0
    %1148 = vmatpush1.bf16.msra.mxu0 0
    %1149 = vmatprep.subr.bf16.mxu0 0
    %1150 = vmatpush1.bf16.msra.mxu0 0
    %1151 = vmatprep.subr.bf16.mxu0 0
    %1152 = vmatpush1.bf16.msra.mxu0 0
    %1153 = vmatprep.subr.bf16.mxu0 0
    %1154 = vmatpush1.bf16.msra.mxu0 0
    %1155 = vmatprep.subr.bf16.mxu0 0
    %1156 = vmatpush1.bf16.msra.mxu0 0
    %1157 = vmatprep.subr.bf16.mxu0 0
    %1158 = vmatpush1.bf16.msra.mxu0 0
    %1159 = vmatprep.subr.bf16.mxu0 0
    %1160 = vmatpush1.bf16.msra.mxu0 0
    %1161 = vmatprep.subr.bf16.mxu0 0
    %1162 = vmatpush1.bf16.msra.mxu0 0
    %1163 = vmatprep.subr.bf16.mxu0 0
    %1164 = vmatpush1.bf16.msra.mxu0 0
    %1165 = vmatprep.subr.bf16.mxu0 0
    %1166 = vmatpush1.bf16.msra.mxu0 0
    %1167 = vmatprep.subr.bf16.mxu0 0
    %1168 = vmatpush1.bf16.msra.mxu0 0
    %1169 = vmatprep.subr.bf16.mxu0 0
    %1170 = vmatpush1.bf16.msra.mxu0 0
    %1171 = vmatprep.mubr.bf16.mxu0 0
    %1172 = vmatmul.mubr.bf16.gmra.mrb[0].mxu0 %v50
    %v1173 = vpop.f32.mrb[0].mxu0
    %v1174 = vadd.f32 0.0, %v1173
    %v1175 = vpop.f32.mrb[0].mxu0
    %v1176 = vpop.f32.mrb[0].mxu0
    %v1177 = vadd.f32 0.0, %v1176
    %v1178 = vpop.f32.mrb[0].mxu0
    %1179 = vdwg.mxu0
    %s1180 = scalar_lea.vmem %s2, 32
    %v1181 = vld [vmem:[%s1180] sm:$0xf]
    %v1182 = vld [vmem:[%s1180 + $0x4] sm:$0xf]
    %v1183 = vld [vmem:[%s1180 + $0x8] sm:$0xf]
    %v1184 = vld [vmem:[%s1180 + $0xc] sm:$0xf]
    %v1189 = vunpack.c.l.b16 %v1181
    %v1190 = vunpack.c.l.b16 %v1182
    %v1191 = vunpack.c.l.b16 %v1183
    %v1192 = vunpack.c.l.b16 %v1184
    %v1193 = vpack.c.b16 %v1190, %v1189
    %v1194 = vpack.c.b16 %v1192, %v1191
    %1197 = vmatprep.subr.bf16.mxu0 0
    %1198 = vmatpush1.bf16.msra.mxu0 %v1193
    %1199 = vmatprep.subr.bf16.mxu0 0
    %1200 = vmatpush1.bf16.msra.mxu0 %v1194
    %1201 = vmatprep.subr.bf16.mxu0 0
    %1202 = vmatpush1.bf16.msra.mxu0 0
    %1203 = vmatprep.subr.bf16.mxu0 0
    %1204 = vmatpush1.bf16.msra.mxu0 0
    %1205 = vmatprep.subr.bf16.mxu0 0
    %1206 = vmatpush1.bf16.msra.mxu0 0
    %1207 = vmatprep.subr.bf16.mxu0 0
    %1208 = vmatpush1.bf16.msra.mxu0 0
    %1209 = vmatprep.subr.bf16.mxu0 0
    %1210 = vmatpush1.bf16.msra.mxu0 0
    %1211 = vmatprep.subr.bf16.mxu0 0
    %1212 = vmatpush1.bf16.msra.mxu0 0
    %1213 = vmatprep.subr.bf16.mxu0 0
    %1214 = vmatpush1.bf16.msra.mxu0 0
    %1215 = vmatprep.subr.bf16.mxu0 0
    %1216 = vmatpush1.bf16.msra.mxu0 0
    %1217 = vmatprep.subr.bf16.mxu0 0
    %1218 = vmatpush1.bf16.msra.mxu0 0
    %1219 = vmatprep.subr.bf16.mxu0 0
    %1220 = vmatpush1.bf16.msra.mxu0 0
    %1221 = vmatprep.subr.bf16.mxu0 0
    %1222 = vmatpush1.bf16.msra.mxu0 0
    %1223 = vmatprep.subr.bf16.mxu0 0
    %1224 = vmatpush1.bf16.msra.mxu0 0
    %1225 = vmatprep.subr.bf16.mxu0 0
    %1226 = vmatpush1.bf16.msra.mxu0 0
    %1227 = vmatprep.subr.bf16.mxu0 0
    %1228 = vmatpush1.bf16.msra.mxu0 0
    %1229 = vmatprep.mubr.bf16.mxu0 0
    %1230 = vmatmul.mubr.bf16.gmra.mrb[0].mxu0 %v50
    %v1231 = vpop.f32.mrb[0].mxu0
    %v1232 = vadd.f32 0.0, %v1231
    %v1233 = vpop.f32.mrb[0].mxu0
    %v1234 = vpop.f32.mrb[0].mxu0
    %v1235 = vadd.f32 0.0, %v1234
    %v1236 = vpop.f32.mrb[0].mxu0
    %1237 = vdwg.mxu0
    %s1238 = scalar_lea.vmem %s3, 32
    %v1239 = vld [vmem:[%s1238] sm:$0xf]
    %v1240 = vld [vmem:[%s1238 + $0x4] sm:$0xf]
    %v1241 = vld [vmem:[%s1238 + $0x8] sm:$0xf]
    %v1242 = vld [vmem:[%s1238 + $0xc] sm:$0xf]
    %v1247 = vunpack.c.l.b16 %v1239
    %v1248 = vunpack.c.l.b16 %v1240
    %v1249 = vunpack.c.l.b16 %v1241
    %v1250 = vunpack.c.l.b16 %v1242
    %v1251 = vpack.c.b16 %v1248, %v1247
    %v1252 = vpack.c.b16 %v1250, %v1249
    %1255 = vmatprep.subr.bf16.mxu0 0
    %1256 = vmatpush1.bf16.msra.mxu0 %v1251
    %1257 = vmatprep.subr.bf16.mxu0 0
    %1258 = vmatpush1.bf16.msra.mxu0 %v1252
    %1259 = vmatprep.subr.bf16.mxu0 0
    %1260 = vmatpush1.bf16.msra.mxu0 0
    %1261 = vmatprep.subr.bf16.mxu0 0
    %1262 = vmatpush1.bf16.msra.mxu0 0
    %1263 = vmatprep.subr.bf16.mxu0 0
    %1264 = vmatpush1.bf16.msra.mxu0 0
    %1265 = vmatprep.subr.bf16.mxu0 0
    %1266 = vmatpush1.bf16.msra.mxu0 0
    %1267 = vmatprep.subr.bf16.mxu0 0
    %1268 = vmatpush1.bf16.msra.mxu0 0
    %1269 = vmatprep.subr.bf16.mxu0 0
    %1270 = vmatpush1.bf16.msra.mxu0 0
    %1271 = vmatprep.subr.bf16.mxu0 0
    %1272 = vmatpush1.bf16.msra.mxu0 0
    %1273 = vmatprep.subr.bf16.mxu0 0
    %1274 = vmatpush1.bf16.msra.mxu0 0
    %1275 = vmatprep.subr.bf16.mxu0 0
    %1276 = vmatpush1.bf16.msra.mxu0 0
    %1277 = vmatprep.subr.bf16.mxu0 0
    %1278 = vmatpush1.bf16.msra.mxu0 0
    %1279 = vmatprep.subr.bf16.mxu0 0
    %1280 = vmatpush1.bf16.msra.mxu0 0
    %1281 = vmatprep.subr.bf16.mxu0 0
    %1282 = vmatpush1.bf16.msra.mxu0 0
    %1283 = vmatprep.subr.bf16.mxu0 0
    %1284 = vmatpush1.bf16.msra.mxu0 0
    %1285 = vmatprep.subr.bf16.mxu0 0
    %1286 = vmatpush1.bf16.msra.mxu0 0
    %1287 = vmatprep.mubr.bf16.mxu0 0
    %1288 = vmatmul.mubr.bf16.gmra.mrb[0].mxu0 %v50
    %v1289 = vpop.f32.mrb[0].mxu0
    %v1290 = vadd.f32 0.0, %v1289
    %v1291 = vpop.f32.mrb[0].mxu0
    %v1292 = vpop.f32.mrb[0].mxu0
    %v1293 = vadd.f32 0.0, %v1292
    %v1294 = vpop.f32.mrb[0].mxu0
    %1295 = vdwg.mxu0
    %v1297 = vsel %vm207, %v1174, 0
    %v1300 = vsel %vm207, %v1232, 0
    %1302 = vmatprep.subr.mxu0 0.0
    %1303 = vmatpush1.xpose.msra.mxu0 %v1300
    %1304 = vmatprep.subr.mxu0 0.0
    %1305 = vmatpush1.xpose.msra.mxu0 0.0
    %1306 = vmatprep.subr.mxu0 0.0
    %1307 = vmatpush1.xpose.msra.mxu0 0.0
    %1308 = vmatprep.subr.mxu0 0.0
    %1309 = vmatpush1.xpose.msra.mxu0 0.0
    %1310 = vmatprep.subr.mxu0 0.0
    %1311 = vmatpush1.xpose.msra.mxu0 0.0
    %1312 = vmatprep.subr.mxu0 0.0
    %1313 = vmatpush1.xpose.msra.mxu0 0.0
    %1314 = vmatprep.subr.mxu0 0.0
    %1315 = vmatpush1.xpose.msra.mxu0 0.0
    %1316 = vmatprep.subr.mxu0 0.0
    %1317 = vmatpush1.xpose.msra.mxu0 0.0
    %1318 = vmatprep.subr.mxu0 0.0
    %1319 = vmatpush1.xpose.msra.mxu0 0.0
    %1320 = vmatprep.subr.mxu0 0.0
    %1321 = vmatpush1.xpose.msra.mxu0 0.0
    %1322 = vmatprep.subr.mxu0 0.0
    %1323 = vmatpush1.xpose.msra.mxu0 0.0
    %1324 = vmatprep.subr.mxu0 0.0
    %1325 = vmatpush1.xpose.msra.mxu0 0.0
    %1326 = vmatprep.subr.mxu0 0.0
    %1327 = vmatpush1.xpose.msra.mxu0 0.0
    %1328 = vmatprep.subr.mxu0 0.0
    %1329 = vmatpush1.xpose.msra.mxu0 0.0
    %1330 = vmatprep.subr.mxu0 0.0
    %1331 = vmatpush1.xpose.msra.mxu0 0.0
    %1332 = vmatprep.subr.mxu0 0.0
    %1333 = vmatpush1.xpose.msra.mxu0 0.0
    %1334 = vmatprep.subr.mxu0 0.0
    %1335 = vmatpush1.xpose.msra.mxu0 0.0
    %1336 = vmatprep.subr.mxu0 0.0
    %1337 = vmatpush1.xpose.msra.mxu0 0.0
    %1338 = vmatprep.subr.mxu0 0.0
    %1339 = vmatpush1.xpose.msra.mxu0 0.0
    %1340 = vmatprep.subr.mxu0 0.0
    %1341 = vmatpush1.xpose.msra.mxu0 0.0
    %1342 = vmatprep.subr.mxu0 0.0
    %1343 = vmatpush1.xpose.msra.mxu0 0.0
    %1344 = vmatprep.subr.mxu0 0.0
    %1345 = vmatpush1.xpose.msra.mxu0 0.0
    %1346 = vmatprep.subr.mxu0 0.0
    %1347 = vmatpush1.xpose.msra.mxu0 0.0
    %1348 = vmatprep.subr.mxu0 0.0
    %1349 = vmatpush1.xpose.msra.mxu0 0.0
    %1350 = vmatprep.subr.mxu0 0.0
    %1351 = vmatpush1.xpose.msra.mxu0 0.0
    %1352 = vmatprep.subr.mxu0 0.0
    %1353 = vmatpush1.xpose.msra.mxu0 0.0
    %1354 = vmatprep.subr.mxu0 0.0
    %1355 = vmatpush1.xpose.msra.mxu0 0.0
    %1356 = vmatprep.subr.mxu0 0.0
    %1357 = vmatpush1.xpose.msra.mxu0 0.0
    %1358 = vmatprep.subr.mxu0 0.0
    %1359 = vmatpush1.xpose.msra.mxu0 0.0
    %1360 = vmatprep.subr.mxu0 0.0
    %1361 = vmatpush1.xpose.msra.mxu0 0.0
    %1362 = vmatprep.subr.mxu0 0.0
    %1363 = vmatpush1.xpose.msra.mxu0 0.0
    %1364 = vmatprep.subr.mxu0 0.0
    %1365 = vmatpush1.xpose.msra.mxu0 0.0
    %1366 = vmatprep.mubr.f32.mxu0 0.0
    %1367 = vmatmul.mubr.f32.gmra.mrb[0].mxu0 %v1297
    %v1368 = vpop.f32.mrb[0].mxu0
    %v1369 = vadd.f32 0.0, %v1368
    %v1370 = vpop.f32.mrb[0].mxu0
    %1371 = vdwg.mxu0
    %v1372 = vsel %vm207, %v1369, -inf
    %1373 = vmax.xlane.f32.xlu0 %v1372
    %v1374 = vpop.xlane.xlu0 %1373
    %v1375 = vsub.f32 %v1369, %v1374
    %v1376 = vmul.f32 %v1375, 1.442695
    %v1377 = vpow.pop %v1376
    %v1378 = vsel %vm207, %v1377, 0.0
    %1379 = vadd.xlane.f32.xlu0 %v1378
    %v1380 = vpop.xlane.xlu0 %1379
    %v1381 = vrcp.pop %v1380
    %v1382 = vmul.f32 %v1377, %v1381
    %v1384 = vsel %vm207, %v1382, 0
    %1386 = vmatprep.subr.mxu0 0.0
    %1387 = vmatpush1.msra.mxu0 %v1290
    %1388 = vmatprep.subr.mxu0 0.0
    %1389 = vmatpush1.msra.mxu0 0.0
    %1390 = vmatprep.subr.mxu0 0.0
    %1391 = vmatpush1.msra.mxu0 0.0
    %1392 = vmatprep.subr.mxu0 0.0
    %1393 = vmatpush1.msra.mxu0 0.0
    %1394 = vmatprep.subr.mxu0 0.0
    %1395 = vmatpush1.msra.mxu0 0.0
    %1396 = vmatprep.subr.mxu0 0.0
    %1397 = vmatpush1.msra.mxu0 0.0
    %1398 = vmatprep.subr.mxu0 0.0
    %1399 = vmatpush1.msra.mxu0 0.0
    %1400 = vmatprep.subr.mxu0 0.0
    %1401 = vmatpush1.msra.mxu0 0.0
    %1402 = vmatprep.subr.mxu0 0.0
    %1403 = vmatpush1.msra.mxu0 0.0
    %1404 = vmatprep.subr.mxu0 0.0
    %1405 = vmatpush1.msra.mxu0 0.0
    %1406 = vmatprep.subr.mxu0 0.0
    %1407 = vmatpush1.msra.mxu0 0.0
    %1408 = vmatprep.subr.mxu0 0.0
    %1409 = vmatpush1.msra.mxu0 0.0
    %1410 = vmatprep.subr.mxu0 0.0
    %1411 = vmatpush1.msra.mxu0 0.0
    %1412 = vmatprep.subr.mxu0 0.0
    %1413 = vmatpush1.msra.mxu0 0.0
    %1414 = vmatprep.subr.mxu0 0.0
    %1415 = vmatpush1.msra.mxu0 0.0
    %1416 = vmatprep.subr.mxu0 0.0
    %1417 = vmatpush1.msra.mxu0 0.0
    %1418 = vmatprep.subr.mxu0 0.0
    %1419 = vmatpush1.msra.mxu0 0.0
    %1420 = vmatprep.subr.mxu0 0.0
    %1421 = vmatpush1.msra.mxu0 0.0
    %1422 = vmatprep.subr.mxu0 0.0
    %1423 = vmatpush1.msra.mxu0 0.0
    %1424 = vmatprep.subr.mxu0 0.0
    %1425 = vmatpush1.msra.mxu0 0.0
    %1426 = vmatprep.subr.mxu0 0.0
    %1427 = vmatpush1.msra.mxu0 0.0
    %1428 = vmatprep.subr.mxu0 0.0
    %1429 = vmatpush1.msra.mxu0 0.0
    %1430 = vmatprep.subr.mxu0 0.0
    %1431 = vmatpush1.msra.mxu0 0.0
    %1432 = vmatprep.subr.mxu0 0.0
    %1433 = vmatpush1.msra.mxu0 0.0
    %1434 = vmatprep.subr.mxu0 0.0
    %1435 = vmatpush1.msra.mxu0 0.0
    %1436 = vmatprep.subr.mxu0 0.0
    %1437 = vmatpush1.msra.mxu0 0.0
    %1438 = vmatprep.subr.mxu0 0.0
    %1439 = vmatpush1.msra.mxu0 0.0
    %1440 = vmatprep.subr.mxu0 0.0
    %1441 = vmatpush1.msra.mxu0 0.0
    %1442 = vmatprep.subr.mxu0 0.0
    %1443 = vmatpush1.msra.mxu0 0.0
    %1444 = vmatprep.subr.mxu0 0.0
    %1445 = vmatpush1.msra.mxu0 0.0
    %1446 = vmatprep.subr.mxu0 0.0
    %1447 = vmatpush1.msra.mxu0 0.0
    %1448 = vmatprep.subr.mxu0 0.0
    %1449 = vmatpush1.msra.mxu0 0.0
    %1450 = vmatprep.mubr.f32.mxu0 0.0
    %1451 = vmatmul.mubr.f32.gmra.mrb[0].mxu0 %v1384
    %v1452 = vpop.f32.mrb[0].mxu0
    %v1453 = vadd.f32 0.0, %v1452
    %v1454 = vpop.f32.mrb[0].mxu0
    %1455 = vdwg.mxu0
    %v1457 = vsel %vm207, %v1177, 0
    %v1460 = vsel %vm207, %v1235, 0
    %1462 = vmatprep.subr.mxu0 0.0
    %1463 = vmatpush1.xpose.msra.mxu0 %v1460
    %1464 = vmatprep.subr.mxu0 0.0
    %1465 = vmatpush1.xpose.msra.mxu0 0.0
    %1466 = vmatprep.subr.mxu0 0.0
    %1467 = vmatpush1.xpose.msra.mxu0 0.0
    %1468 = vmatprep.subr.mxu0 0.0
    %1469 = vmatpush1.xpose.msra.mxu0 0.0
    %1470 = vmatprep.subr.mxu0 0.0
    %1471 = vmatpush1.xpose.msra.mxu0 0.0
    %1472 = vmatprep.subr.mxu0 0.0
    %1473 = vmatpush1.xpose.msra.mxu0 0.0
    %1474 = vmatprep.subr.mxu0 0.0
    %1475 = vmatpush1.xpose.msra.mxu0 0.0
    %1476 = vmatprep.subr.mxu0 0.0
    %1477 = vmatpush1.xpose.msra.mxu0 0.0
    %1478 = vmatprep.subr.mxu0 0.0
    %1479 = vmatpush1.xpose.msra.mxu0 0.0
    %1480 = vmatprep.subr.mxu0 0.0
    %1481 = vmatpush1.xpose.msra.mxu0 0.0
    %1482 = vmatprep.subr.mxu0 0.0
    %1483 = vmatpush1.xpose.msra.mxu0 0.0
    %1484 = vmatprep.subr.mxu0 0.0
    %1485 = vmatpush1.xpose.msra.mxu0 0.0
    %1486 = vmatprep.subr.mxu0 0.0
    %1487 = vmatpush1.xpose.msra.mxu0 0.0
    %1488 = vmatprep.subr.mxu0 0.0
    %1489 = vmatpush1.xpose.msra.mxu0 0.0
    %1490 = vmatprep.subr.mxu0 0.0
    %1491 = vmatpush1.xpose.msra.mxu0 0.0
    %1492 = vmatprep.subr.mxu0 0.0
    %1493 = vmatpush1.xpose.msra.mxu0 0.0
    %1494 = vmatprep.subr.mxu0 0.0
    %1495 = vmatpush1.xpose.msra.mxu0 0.0
    %1496 = vmatprep.subr.mxu0 0.0
    %1497 = vmatpush1.xpose.msra.mxu0 0.0
    %1498 = vmatprep.subr.mxu0 0.0
    %1499 = vmatpush1.xpose.msra.mxu0 0.0
    %1500 = vmatprep.subr.mxu0 0.0
    %1501 = vmatpush1.xpose.msra.mxu0 0.0
    %1502 = vmatprep.subr.mxu0 0.0
    %1503 = vmatpush1.xpose.msra.mxu0 0.0
    %1504 = vmatprep.subr.mxu0 0.0
    %1505 = vmatpush1.xpose.msra.mxu0 0.0
    %1506 = vmatprep.subr.mxu0 0.0
    %1507 = vmatpush1.xpose.msra.mxu0 0.0
    %1508 = vmatprep.subr.mxu0 0.0
    %1509 = vmatpush1.xpose.msra.mxu0 0.0
    %1510 = vmatprep.subr.mxu0 0.0
    %1511 = vmatpush1.xpose.msra.mxu0 0.0
    %1512 = vmatprep.subr.mxu0 0.0
    %1513 = vmatpush1.xpose.msra.mxu0 0.0
    %1514 = vmatprep.subr.mxu0 0.0
    %1515 = vmatpush1.xpose.msra.mxu0 0.0
    %1516 = vmatprep.subr.mxu0 0.0
    %1517 = vmatpush1.xpose.msra.mxu0 0.0
    %1518 = vmatprep.subr.mxu0 0.0
    %1519 = vmatpush1.xpose.msra.mxu0 0.0
    %1520 = vmatprep.subr.mxu0 0.0
    %1521 = vmatpush1.xpose.msra.mxu0 0.0
    %1522 = vmatprep.subr.mxu0 0.0
    %1523 = vmatpush1.xpose.msra.mxu0 0.0
    %1524 = vmatprep.subr.mxu0 0.0
    %1525 = vmatpush1.xpose.msra.mxu0 0.0
    %1526 = vmatprep.mubr.f32.mxu0 0.0
    %1527 = vmatmul.mubr.f32.gmra.mrb[0].mxu0 %v1457
    %v1528 = vpop.f32.mrb[0].mxu0
    %v1529 = vadd.f32 0.0, %v1528
    %v1530 = vpop.f32.mrb[0].mxu0
    %1531 = vdwg.mxu0
    %v1532 = vsel %vm207, %v1529, -inf
    %1533 = vmax.xlane.f32.xlu0 %v1532
    %v1534 = vpop.xlane.xlu0 %1533
    %v1535 = vsub.f32 %v1529, %v1534
    %v1536 = vmul.f32 %v1535, 1.442695
    %v1537 = vpow.pop %v1536
    %v1538 = vsel %vm207, %v1537, 0.0
    %1539 = vadd.xlane.f32.xlu0 %v1538
    %v1540 = vpop.xlane.xlu0 %1539
    %v1541 = vrcp.pop %v1540
    %v1542 = vmul.f32 %v1537, %v1541
    %v1544 = vsel %vm207, %v1542, 0
    %1546 = vmatprep.subr.mxu0 0.0
    %1547 = vmatpush1.msra.mxu0 %v1293
    %1548 = vmatprep.subr.mxu0 0.0
    %1549 = vmatpush1.msra.mxu0 0.0
    %1550 = vmatprep.subr.mxu0 0.0
    %1551 = vmatpush1.msra.mxu0 0.0
    %1552 = vmatprep.subr.mxu0 0.0
    %1553 = vmatpush1.msra.mxu0 0.0
    %1554 = vmatprep.subr.mxu0 0.0
    %1555 = vmatpush1.msra.mxu0 0.0
    %1556 = vmatprep.subr.mxu0 0.0
    %1557 = vmatpush1.msra.mxu0 0.0
    %1558 = vmatprep.subr.mxu0 0.0
    %1559 = vmatpush1.msra.mxu0 0.0
    %1560 = vmatprep.subr.mxu0 0.0
    %1561 = vmatpush1.msra.mxu0 0.0
    %1562 = vmatprep.subr.mxu0 0.0
    %1563 = vmatpush1.msra.mxu0 0.0
    %1564 = vmatprep.subr.mxu0 0.0
    %1565 = vmatpush1.msra.mxu0 0.0
    %1566 = vmatprep.subr.mxu0 0.0
    %1567 = vmatpush1.msra.mxu0 0.0
    %1568 = vmatprep.subr.mxu0 0.0
    %1569 = vmatpush1.msra.mxu0 0.0
    %1570 = vmatprep.subr.mxu0 0.0
    %1571 = vmatpush1.msra.mxu0 0.0
    %1572 = vmatprep.subr.mxu0 0.0
    %1573 = vmatpush1.msra.mxu0 0.0
    %1574 = vmatprep.subr.mxu0 0.0
    %1575 = vmatpush1.msra.mxu0 0.0
    %1576 = vmatprep.subr.mxu0 0.0
    %1577 = vmatpush1.msra.mxu0 0.0
    %1578 = vmatprep.subr.mxu0 0.0
    %1579 = vmatpush1.msra.mxu0 0.0
    %1580 = vmatprep.subr.mxu0 0.0
    %1581 = vmatpush1.msra.mxu0 0.0
    %1582 = vmatprep.subr.mxu0 0.0
    %1583 = vmatpush1.msra.mxu0 0.0
    %1584 = vmatprep.subr.mxu0 0.0
    %1585 = vmatpush1.msra.mxu0 0.0
    %1586 = vmatprep.subr.mxu0 0.0
    %1587 = vmatpush1.msra.mxu0 0.0
    %1588 = vmatprep.subr.mxu0 0.0
    %1589 = vmatpush1.msra.mxu0 0.0
    %1590 = vmatprep.subr.mxu0 0.0
    %1591 = vmatpush1.msra.mxu0 0.0
    %1592 = vmatprep.subr.mxu0 0.0
    %1593 = vmatpush1.msra.mxu0 0.0
    %1594 = vmatprep.subr.mxu0 0.0
    %1595 = vmatpush1.msra.mxu0 0.0
    %1596 = vmatprep.subr.mxu0 0.0
    %1597 = vmatpush1.msra.mxu0 0.0
    %1598 = vmatprep.subr.mxu0 0.0
    %1599 = vmatpush1.msra.mxu0 0.0
    %1600 = vmatprep.subr.mxu0 0.0
    %1601 = vmatpush1.msra.mxu0 0.0
    %1602 = vmatprep.subr.mxu0 0.0
    %1603 = vmatpush1.msra.mxu0 0.0
    %1604 = vmatprep.subr.mxu0 0.0
    %1605 = vmatpush1.msra.mxu0 0.0
    %1606 = vmatprep.subr.mxu0 0.0
    %1607 = vmatpush1.msra.mxu0 0.0
    %1608 = vmatprep.subr.mxu0 0.0
    %1609 = vmatpush1.msra.mxu0 0.0
    %1610 = vmatprep.mubr.f32.mxu0 0.0
    %1611 = vmatmul.mubr.f32.gmra.mrb[0].mxu0 %v1544
    %v1612 = vpop.f32.mrb[0].mxu0
    %v1613 = vadd.f32 0.0, %v1612
    %v1614 = vpop.f32.mrb[0].mxu0
    %1615 = vdwg.mxu0
    %v1616 = vpack.c.bf16 %v1613, %v1453
    %s1617 = scalar_lea.vmem %s4, 8
    %v1618 = vld [vmem:[%s1617] sm:$0xf]
    %v1620 = vsel %vm207, %v1616, 0
    %v1623 = vsel %vm1030, %v1618, 0
    %1625 = vmatprep.subr.bf16.mxu0 0
    %1626 = vmatpush1.bf16.msra.mxu0 %v1623
    %1627 = vmatprep.subr.bf16.mxu0 0
    %1628 = vmatpush1.bf16.msra.mxu0 0
    %1629 = vmatprep.subr.bf16.mxu0 0
    %1630 = vmatpush1.bf16.msra.mxu0 0
    %1631 = vmatprep.subr.bf16.mxu0 0
    %1632 = vmatpush1.bf16.msra.mxu0 0
    %1633 = vmatprep.subr.bf16.mxu0 0
    %1634 = vmatpush1.bf16.msra.mxu0 0
    %1635 = vmatprep.subr.bf16.mxu0 0
    %1636 = vmatpush1.bf16.msra.mxu0 0
    %1637 = vmatprep.subr.bf16.mxu0 0
    %1638 = vmatpush1.bf16.msra.mxu0 0
    %1639 = vmatprep.subr.bf16.mxu0 0
    %1640 = vmatpush1.bf16.msra.mxu0 0
    %1641 = vmatprep.subr.bf16.mxu0 0
    %1642 = vmatpush1.bf16.msra.mxu0 0
    %1643 = vmatprep.subr.bf16.mxu0 0
    %1644 = vmatpush1.bf16.msra.mxu0 0
    %1645 = vmatprep.subr.bf16.mxu0 0
    %1646 = vmatpush1.bf16.msra.mxu0 0
    %1647 = vmatprep.subr.bf16.mxu0 0
    %1648 = vmatpush1.bf16.msra.mxu0 0
    %1649 = vmatprep.subr.bf16.mxu0 0
    %1650 = vmatpush1.bf16.msra.mxu0 0
    %1651 = vmatprep.subr.bf16.mxu0 0
    %1652 = vmatpush1.bf16.msra.mxu0 0
    %1653 = vmatprep.subr.bf16.mxu0 0
    %1654 = vmatpush1.bf16.msra.mxu0 0
    %1655 = vmatprep.subr.bf16.mxu0 0
    %1656 = vmatpush1.bf16.msra.mxu0 0
    %1657 = vmatprep.mubr.bf16.mxu0 0
    %1658 = vmatmul.mubr.bf16.gmra.mrb[0].mxu0 %v1620
    %v1659 = vpop.f32.mrb[0].mxu0
    %v1660 = vadd.f32 0.0, %v1659
    %v1661 = vpop.f32.mrb[0].mxu0
    %v1662 = vpop.f32.mrb[0].mxu0
    %v1663 = vadd.f32 0.0, %v1662
    %v1664 = vpop.f32.mrb[0].mxu0
    %1665 = vdwg.mxu0
    %v1666 = vadd.f32 %v1116, %v1660
    %v1667 = vadd.f32 %v1119, %v1663
    %s1668 = scalar_lea.vmem %s1, 48
    %v1669 = vld [vmem:[%s1668] sm:$0xf]
    %v1670 = vld [vmem:[%s1668 + $0x4] sm:$0xf]
    %v1671 = vld [vmem:[%s1668 + $0x8] sm:$0xf]
    %v1672 = vld [vmem:[%s1668 + $0xc] sm:$0xf]
    %v1677 = vunpack.c.l.b16 %v1669
    %v1678 = vunpack.c.l.b16 %v1670
    %v1679 = vunpack.c.l.b16 %v1671
    %v1680 = vunpack.c.l.b16 %v1672
    %v1681 = vpack.c.b16 %v1678, %v1677
    %v1682 = vpack.c.b16 %v1680, %v1679
    %1685 = vmatprep.subr.bf16.mxu0 0
    %1686 = vmatpush1.bf16.msra.mxu0 %v1681
    %1687 = vmatprep.subr.bf16.mxu0 0
    %1688 = vmatpush1.bf16.msra.mxu0 %v1682
    %1689 = vmatprep.subr.bf16.mxu0 0
    %1690 = vmatpush1.bf16.msra.mxu0 0
    %1691 = vmatprep.subr.bf16.mxu0 0
    %1692 = vmatpush1.bf16.msra.mxu0 0
    %1693 = vmatprep.subr.bf16.mxu0 0
    %1694 = vmatpush1.bf16.msra.mxu0 0
    %1695 = vmatprep.subr.bf16.mxu0 0
    %1696 = vmatpush1.bf16.msra.mxu0 0
    %1697 = vmatprep.subr.bf16.mxu0 0
    %1698 = vmatpush1.bf16.msra.mxu0 0
    %1699 = vmatprep.subr.bf16.mxu0 0
    %1700 = vmatpush1.bf16.msra.mxu0 0
    %1701 = vmatprep.subr.bf16.mxu0 0
    %1702 = vmatpush1.bf16.msra.mxu0 0
    %1703 = vmatprep.subr.bf16.mxu0 0
    %1704 = vmatpush1.bf16.msra.mxu0 0
    %1705 = vmatprep.subr.bf16.mxu0 0
    %1706 = vmatpush1.bf16.msra.mxu0 0
    %1707 = vmatprep.subr.bf16.mxu0 0
    %1708 = vmatpush1.bf16.msra.mxu0 0
    %1709 = vmatprep.subr.bf16.mxu0 0
    %1710 = vmatpush1.bf16.msra.mxu0 0
    %1711 = vmatprep.subr.bf16.mxu0 0
    %1712 = vmatpush1.bf16.msra.mxu0 0
    %1713 = vmatprep.subr.bf16.mxu0 0
    %1714 = vmatpush1.bf16.msra.mxu0 0
    %1715 = vmatprep.subr.bf16.mxu0 0
    %1716 = vmatpush1.bf16.msra.mxu0 0
    %1717 = vmatprep.mubr.bf16.mxu0 0
    %1718 = vmatmul.mubr.bf16.gmra.mrb[0].mxu0 %v50
    %v1719 = vpop.f32.mrb[0].mxu0
    %v1720 = vadd.f32 0.0, %v1719
    %v1721 = vpop.f32.mrb[0].mxu0
    %v1722 = vpop.f32.mrb[0].mxu0
    %v1723 = vadd.f32 0.0, %v1722
    %v1724 = vpop.f32.mrb[0].mxu0
    %1725 = vdwg.mxu0
    %s1726 = scalar_lea.vmem %s2, 48
    %v1727 = vld [vmem:[%s1726] sm:$0xf]
    %v1728 = vld [vmem:[%s1726 + $0x4] sm:$0xf]
    %v1729 = vld [vmem:[%s1726 + $0x8] sm:$0xf]
    %v1730 = vld [vmem:[%s1726 + $0xc] sm:$0xf]
    %v1735 = vunpack.c.l.b16 %v1727
    %v1736 = vunpack.c.l.b16 %v1728
    %v1737 = vunpack.c.l.b16 %v1729
    %v1738 = vunpack.c.l.b16 %v1730
    %v1739 = vpack.c.b16 %v1736, %v1735
    %v1740 = vpack.c.b16 %v1738, %v1737
    %1743 = vmatprep.subr.bf16.mxu0 0
    %1744 = vmatpush1.bf16.msra.mxu0 %v1739
    %1745 = vmatprep.subr.bf16.mxu0 0
    %1746 = vmatpush1.bf16.msra.mxu0 %v1740
    %1747 = vmatprep.subr.bf16.mxu0 0
    %1748 = vmatpush1.bf16.msra.mxu0 0
    %1749 = vmatprep.subr.bf16.mxu0 0
    %1750 = vmatpush1.bf16.msra.mxu0 0
    %1751 = vmatprep.subr.bf16.mxu0 0
    %1752 = vmatpush1.bf16.msra.mxu0 0
    %1753 = vmatprep.subr.bf16.mxu0 0
    %1754 = vmatpush1.bf16.msra.mxu0 0
    %1755 = vmatprep.subr.bf16.mxu0 0
    %1756 = vmatpush1.bf16.msra.mxu0 0
    %1757 = vmatprep.subr.bf16.mxu0 0
    %1758 = vmatpush1.bf16.msra.mxu0 0
    %1759 = vmatprep.subr.bf16.mxu0 0
    %1760 = vmatpush1.bf16.msra.mxu0 0
    %1761 = vmatprep.subr.bf16.mxu0 0
    %1762 = vmatpush1.bf16.msra.mxu0 0
    %1763 = vmatprep.subr.bf16.mxu0 0
    %1764 = vmatpush1.bf16.msra.mxu0 0
    %1765 = vmatprep.subr.bf16.mxu0 0
    %1766 = vmatpush1.bf16.msra.mxu0 0
    %1767 = vmatprep.subr.bf16.mxu0 0
    %1768 = vmatpush1.bf16.msra.mxu0 0
    %1769 = vmatprep.subr.bf16.mxu0 0
    %1770 = vmatpush1.bf16.msra.mxu0 0
    %1771 = vmatprep.subr.bf16.mxu0 0
    %1772 = vmatpush1.bf16.msra.mxu0 0
    %1773 = vmatprep.subr.bf16.mxu0 0
    %1774 = vmatpush1.bf16.msra.mxu0 0
    %1775 = vmatprep.mubr.bf16.mxu0 0
    %1776 = vmatmul.mubr.bf16.gmra.mrb[0].mxu0 %v50
    %v1777 = vpop.f32.mrb[0].mxu0
    %v1778 = vadd.f32 0.0, %v1777
    %v1779 = vpop.f32.mrb[0].mxu0
    %v1780 = vpop.f32.mrb[0].mxu0
    %v1781 = vadd.f32 0.0, %v1780
    %v1782 = vpop.f32.mrb[0].mxu0
    %1783 = vdwg.mxu0
    %s1784 = scalar_lea.vmem %s3, 48
    %v1785 = vld [vmem:[%s1784] sm:$0xf]
    %v1786 = vld [vmem:[%s1784 + $0x4] sm:$0xf]
    %v1787 = vld [vmem:[%s1784 + $0x8] sm:$0xf]
    %v1788 = vld [vmem:[%s1784 + $0xc] sm:$0xf]
    %v1793 = vunpack.c.l.b16 %v1785
    %v1794 = vunpack.c.l.b16 %v1786
    %v1795 = vunpack.c.l.b16 %v1787
    %v1796 = vunpack.c.l.b16 %v1788
    %v1797 = vpack.c.b16 %v1794, %v1793
    %v1798 = vpack.c.b16 %v1796, %v1795
    %1801 = vmatprep.subr.bf16.mxu0 0
    %1802 = vmatpush1.bf16.msra.mxu0 %v1797
    %1803 = vmatprep.subr.bf16.mxu0 0
    %1804 = vmatpush1.bf16.msra.mxu0 %v1798
    %1805 = vmatprep.subr.bf16.mxu0 0
    %1806 = vmatpush1.bf16.msra.mxu0 0
    %1807 = vmatprep.subr.bf16.mxu0 0
    %1808 = vmatpush1.bf16.msra.mxu0 0
    %1809 = vmatprep.subr.bf16.mxu0 0
    %1810 = vmatpush1.bf16.msra.mxu0 0
    %1811 = vmatprep.subr.bf16.mxu0 0
    %1812 = vmatpush1.bf16.msra.mxu0 0
    %1813 = vmatprep.subr.bf16.mxu0 0
    %1814 = vmatpush1.bf16.msra.mxu0 0
    %1815 = vmatprep.subr.bf16.mxu0 0
    %1816 = vmatpush1.bf16.msra.mxu0 0
    %1817 = vmatprep.subr.bf16.mxu0 0
    %1818 = vmatpush1.bf16.msra.mxu0 0
    %1819 = vmatprep.subr.bf16.mxu0 0
    %1820 = vmatpush1.bf16.msra.mxu0 0
    %1821 = vmatprep.subr.bf16.mxu0 0
    %1822 = vmatpush1.bf16.msra.mxu0 0
    %1823 = vmatprep.subr.bf16.mxu0 0
    %1824 = vmatpush1.bf16.msra.mxu0 0
    %1825 = vmatprep.subr.bf16.mxu0 0
    %1826 = vmatpush1.bf16.msra.mxu0 0
    %1827 = vmatprep.subr.bf16.mxu0 0
    %1828 = vmatpush1.bf16.msra.mxu0 0
    %1829 = vmatprep.subr.bf16.mxu0 0
    %1830 = vmatpush1.bf16.msra.mxu0 0
    %1831 = vmatprep.subr.bf16.mxu0 0
    %1832 = vmatpush1.bf16.msra.mxu0 0
    %1833 = vmatprep.mubr.bf16.mxu0 0
    %1834 = vmatmul.mubr.bf16.gmra.mrb[0].mxu0 %v50
    %v1835 = vpop.f32.mrb[0].mxu0
    %v1836 = vadd.f32 0.0, %v1835
    %v1837 = vpop.f32.mrb[0].mxu0
    %v1838 = vpop.f32.mrb[0].mxu0
    %v1839 = vadd.f32 0.0, %v1838
    %v1840 = vpop.f32.mrb[0].mxu0
    %1841 = vdwg.mxu0
    %v1843 = vsel %vm207, %v1720, 0
    %v1846 = vsel %vm207, %v1778, 0
    %1848 = vmatprep.subr.mxu0 0.0
    %1849 = vmatpush1.xpose.msra.mxu0 %v1846
    %1850 = vmatprep.subr.mxu0 0.0
    %1851 = vmatpush1.xpose.msra.mxu0 0.0
    %1852 = vmatprep.subr.mxu0 0.0
    %1853 = vmatpush1.xpose.msra.mxu0 0.0
    %1854 = vmatprep.subr.mxu0 0.0
    %1855 = vmatpush1.xpose.msra.mxu0 0.0
    %1856 = vmatprep.subr.mxu0 0.0
    %1857 = vmatpush1.xpose.msra.mxu0 0.0
    %1858 = vmatprep.subr.mxu0 0.0
    %1859 = vmatpush1.xpose.msra.mxu0 0.0
    %1860 = vmatprep.subr.mxu0 0.0
    %1861 = vmatpush1.xpose.msra.mxu0 0.0
    %1862 = vmatprep.subr.mxu0 0.0
    %1863 = vmatpush1.xpose.msra.mxu0 0.0
    %1864 = vmatprep.subr.mxu0 0.0
    %1865 = vmatpush1.xpose.msra.mxu0 0.0
    %1866 = vmatprep.subr.mxu0 0.0
    %1867 = vmatpush1.xpose.msra.mxu0 0.0
    %1868 = vmatprep.subr.mxu0 0.0
    %1869 = vmatpush1.xpose.msra.mxu0 0.0
    %1870 = vmatprep.subr.mxu0 0.0
    %1871 = vmatpush1.xpose.msra.mxu0 0.0
    %1872 = vmatprep.subr.mxu0 0.0
    %1873 = vmatpush1.xpose.msra.mxu0 0.0
    %1874 = vmatprep.subr.mxu0 0.0
    %1875 = vmatpush1.xpose.msra.mxu0 0.0
    %1876 = vmatprep.subr.mxu0 0.0
    %1877 = vmatpush1.xpose.msra.mxu0 0.0
    %1878 = vmatprep.subr.mxu0 0.0
    %1879 = vmatpush1.xpose.msra.mxu0 0.0
    %1880 = vmatprep.subr.mxu0 0.0
    %1881 = vmatpush1.xpose.msra.mxu0 0.0
    %1882 = vmatprep.subr.mxu0 0.0
    %1883 = vmatpush1.xpose.msra.mxu0 0.0
    %1884 = vmatprep.subr.mxu0 0.0
    %1885 = vmatpush1.xpose.msra.mxu0 0.0
    %1886 = vmatprep.subr.mxu0 0.0
    %1887 = vmatpush1.xpose.msra.mxu0 0.0
    %1888 = vmatprep.subr.mxu0 0.0
    %1889 = vmatpush1.xpose.msra.mxu0 0.0
    %1890 = vmatprep.subr.mxu0 0.0
    %1891 = vmatpush1.xpose.msra.mxu0 0.0
    %1892 = vmatprep.subr.mxu0 0.0
    %1893 = vmatpush1.xpose.msra.mxu0 0.0
    %1894 = vmatprep.subr.mxu0 0.0
    %1895 = vmatpush1.xpose.msra.mxu0 0.0
    %1896 = vmatprep.subr.mxu0 0.0
    %1897 = vmatpush1.xpose.msra.mxu0 0.0
    %1898 = vmatprep.subr.mxu0 0.0
    %1899 = vmatpush1.xpose.msra.mxu0 0.0
    %1900 = vmatprep.subr.mxu0 0.0
    %1901 = vmatpush1.xpose.msra.mxu0 0.0
    %1902 = vmatprep.subr.mxu0 0.0
    %1903 = vmatpush1.xpose.msra.mxu0 0.0
    %1904 = vmatprep.subr.mxu0 0.0
    %1905 = vmatpush1.xpose.msra.mxu0 0.0
    %1906 = vmatprep.subr.mxu0 0.0
    %1907 = vmatpush1.xpose.msra.mxu0 0.0
    %1908 = vmatprep.subr.mxu0 0.0
    %1909 = vmatpush1.xpose.msra.mxu0 0.0
    %1910 = vmatprep.subr.mxu0 0.0
    %1911 = vmatpush1.xpose.msra.mxu0 0.0
    %1912 = vmatprep.mubr.f32.mxu0 0.0
    %1913 = vmatmul.mubr.f32.gmra.mrb[0].mxu0 %v1843
    %v1914 = vpop.f32.mrb[0].mxu0
    %v1915 = vadd.f32 0.0, %v1914
    %v1916 = vpop.f32.mrb[0].mxu0
    %1917 = vdwg.mxu0
    %v1918 = vsel %vm207, %v1915, -inf
    %1919 = vmax.xlane.f32.xlu0 %v1918
    %v1920 = vpop.xlane.xlu0 %1919
    %v1921 = vsub.f32 %v1915, %v1920
    %v1922 = vmul.f32 %v1921, 1.442695
    %v1923 = vpow.pop %v1922
    %v1924 = vsel %vm207, %v1923, 0.0
    %1925 = vadd.xlane.f32.xlu0 %v1924
    %v1926 = vpop.xlane.xlu0 %1925
    %v1927 = vrcp.pop %v1926
    %v1928 = vmul.f32 %v1923, %v1927
    %v1930 = vsel %vm207, %v1928, 0
    %1932 = vmatprep.subr.mxu0 0.0
    %1933 = vmatpush1.msra.mxu0 %v1836
    %1934 = vmatprep.subr.mxu0 0.0
    %1935 = vmatpush1.msra.mxu0 0.0
    %1936 = vmatprep.subr.mxu0 0.0
    %1937 = vmatpush1.msra.mxu0 0.0
    %1938 = vmatprep.subr.mxu0 0.0
    %1939 = vmatpush1.msra.mxu0 0.0
    %1940 = vmatprep.subr.mxu0 0.0
    %1941 = vmatpush1.msra.mxu0 0.0
    %1942 = vmatprep.subr.mxu0 0.0
    %1943 = vmatpush1.msra.mxu0 0.0
    %1944 = vmatprep.subr.mxu0 0.0
    %1945 = vmatpush1.msra.mxu0 0.0
    %1946 = vmatprep.subr.mxu0 0.0
    %1947 = vmatpush1.msra.mxu0 0.0
    %1948 = vmatprep.subr.mxu0 0.0
    %1949 = vmatpush1.msra.mxu0 0.0
    %1950 = vmatprep.subr.mxu0 0.0
    %1951 = vmatpush1.msra.mxu0 0.0
    %1952 = vmatprep.subr.mxu0 0.0
    %1953 = vmatpush1.msra.mxu0 0.0
    %1954 = vmatprep.subr.mxu0 0.0
    %1955 = vmatpush1.msra.mxu0 0.0
    %1956 = vmatprep.subr.mxu0 0.0
    %1957 = vmatpush1.msra.mxu0 0.0
    %1958 = vmatprep.subr.mxu0 0.0
    %1959 = vmatpush1.msra.mxu0 0.0
    %1960 = vmatprep.subr.mxu0 0.0
    %1961 = vmatpush1.msra.mxu0 0.0
    %1962 = vmatprep.subr.mxu0 0.0
    %1963 = vmatpush1.msra.mxu0 0.0
    %1964 = vmatprep.subr.mxu0 0.0
    %1965 = vmatpush1.msra.mxu0 0.0
    %1966 = vmatprep.subr.mxu0 0.0
    %1967 = vmatpush1.msra.mxu0 0.0
    %1968 = vmatprep.subr.mxu0 0.0
    %1969 = vmatpush1.msra.mxu0 0.0
    %1970 = vmatprep.subr.mxu0 0.0
    %1971 = vmatpush1.msra.mxu0 0.0
    %1972 = vmatprep.subr.mxu0 0.0
    %1973 = vmatpush1.msra.mxu0 0.0
    %1974 = vmatprep.subr.mxu0 0.0
    %1975 = vmatpush1.msra.mxu0 0.0
    %1976 = vmatprep.subr.mxu0 0.0
    %1977 = vmatpush1.msra.mxu0 0.0
    %1978 = vmatprep.subr.mxu0 0.0
    %1979 = vmatpush1.msra.mxu0 0.0
    %1980 = vmatprep.subr.mxu0 0.0
    %1981 = vmatpush1.msra.mxu0 0.0
    %1982 = vmatprep.subr.mxu0 0.0
    %1983 = vmatpush1.msra.mxu0 0.0
    %1984 = vmatprep.subr.mxu0 0.0
    %1985 = vmatpush1.msra.mxu0 0.0
    %1986 = vmatprep.subr.mxu0 0.0
    %1987 = vmatpush1.msra.mxu0 0.0
    %1988 = vmatprep.subr.mxu0 0.0
    %1989 = vmatpush1.msra.mxu0 0.0
    %1990 = vmatprep.subr.mxu0 0.0
    %1991 = vmatpush1.msra.mxu0 0.0
    %1992 = vmatprep.subr.mxu0 0.0
    %1993 = vmatpush1.msra.mxu0 0.0
    %1994 = vmatprep.subr.mxu0 0.0
    %1995 = vmatpush1.msra.mxu0 0.0
    %1996 = vmatprep.mubr.f32.mxu0 0.0
    %1997 = vmatmul.mubr.f32.gmra.mrb[0].mxu0 %v1930
    %v1998 = vpop.f32.mrb[0].mxu0
    %v1999 = vadd.f32 0.0, %v1998
    %v2000 = vpop.f32.mrb[0].mxu0
    %2001 = vdwg.mxu0
    %v2003 = vsel %vm207, %v1723, 0
    %v2006 = vsel %vm207, %v1781, 0
    %2008 = vmatprep.subr.mxu0 0.0
    %2009 = vmatpush1.xpose.msra.mxu0 %v2006
    %2010 = vmatprep.subr.mxu0 0.0
    %2011 = vmatpush1.xpose.msra.mxu0 0.0
    %2012 = vmatprep.subr.mxu0 0.0
    %2013 = vmatpush1.xpose.msra.mxu0 0.0
    %2014 = vmatprep.subr.mxu0 0.0
    %2015 = vmatpush1.xpose.msra.mxu0 0.0
    %2016 = vmatprep.subr.mxu0 0.0
    %2017 = vmatpush1.xpose.msra.mxu0 0.0
    %2018 = vmatprep.subr.mxu0 0.0
    %2019 = vmatpush1.xpose.msra.mxu0 0.0
    %2020 = vmatprep.subr.mxu0 0.0
    %2021 = vmatpush1.xpose.msra.mxu0 0.0
    %2022 = vmatprep.subr.mxu0 0.0
    %2023 = vmatpush1.xpose.msra.mxu0 0.0
    %2024 = vmatprep.subr.mxu0 0.0
    %2025 = vmatpush1.xpose.msra.mxu0 0.0
    %2026 = vmatprep.subr.mxu0 0.0
    %2027 = vmatpush1.xpose.msra.mxu0 0.0
    %2028 = vmatprep.subr.mxu0 0.0
    %2029 = vmatpush1.xpose.msra.mxu0 0.0
    %2030 = vmatprep.subr.mxu0 0.0
    %2031 = vmatpush1.xpose.msra.mxu0 0.0
    %2032 = vmatprep.subr.mxu0 0.0
    %2033 = vmatpush1.xpose.msra.mxu0 0.0
    %2034 = vmatprep.subr.mxu0 0.0
    %2035 = vmatpush1.xpose.msra.mxu0 0.0
    %2036 = vmatprep.subr.mxu0 0.0
    %2037 = vmatpush1.xpose.msra.mxu0 0.0
    %2038 = vmatprep.subr.mxu0 0.0
    %2039 = vmatpush1.xpose.msra.mxu0 0.0
    %2040 = vmatprep.subr.mxu0 0.0
    %2041 = vmatpush1.xpose.msra.mxu0 0.0
    %2042 = vmatprep.subr.mxu0 0.0
    %2043 = vmatpush1.xpose.msra.mxu0 0.0
    %2044 = vmatprep.subr.mxu0 0.0
    %2045 = vmatpush1.xpose.msra.mxu0 0.0
    %2046 = vmatprep.subr.mxu0 0.0
    %2047 = vmatpush1.xpose.msra.mxu0 0.0
    %2048 = vmatprep.subr.mxu0 0.0
    %2049 = vmatpush1.xpose.msra.mxu0 0.0
    %2050 = vmatprep.subr.mxu0 0.0
    %2051 = vmatpush1.xpose.msra.mxu0 0.0
    %2052 = vmatprep.subr.mxu0 0.0
    %2053 = vmatpush1.xpose.msra.mxu0 0.0
    %2054 = vmatprep.subr.mxu0 0.0
    %2055 = vmatpush1.xpose.msra.mxu0 0.0
    %2056 = vmatprep.subr.mxu0 0.0
    %2057 = vmatpush1.xpose.msra.mxu0 0.0
    %2058 = vmatprep.subr.mxu0 0.0
    %2059 = vmatpush1.xpose.msra.mxu0 0.0
    %2060 = vmatprep.subr.mxu0 0.0
    %2061 = vmatpush1.xpose.msra.mxu0 0.0
    %2062 = vmatprep.subr.mxu0 0.0
    %2063 = vmatpush1.xpose.msra.mxu0 0.0
    %2064 = vmatprep.subr.mxu0 0.0
    %2065 = vmatpush1.xpose.msra.mxu0 0.0
    %2066 = vmatprep.subr.mxu0 0.0
    %2067 = vmatpush1.xpose.msra.mxu0 0.0
    %2068 = vmatprep.subr.mxu0 0.0
    %2069 = vmatpush1.xpose.msra.mxu0 0.0
    %2070 = vmatprep.subr.mxu0 0.0
    %2071 = vmatpush1.xpose.msra.mxu0 0.0
    %2072 = vmatprep.mubr.f32.mxu0 0.0
    %2073 = vmatmul.mubr.f32.gmra.mrb[0].mxu0 %v2003
    %v2074 = vpop.f32.mrb[0].mxu0
    %v2075 = vadd.f32 0.0, %v2074
    %v2076 = vpop.f32.mrb[0].mxu0
    %2077 = vdwg.mxu0
    %v2078 = vsel %vm207, %v2075, -inf
    %2079 = vmax.xlane.f32.xlu0 %v2078
    %v2080 = vpop.xlane.xlu0 %2079
    %v2081 = vsub.f32 %v2075, %v2080
    %v2082 = vmul.f32 %v2081, 1.442695
    %v2083 = vpow.pop %v2082
    %v2084 = vsel %vm207, %v2083, 0.0
    %2085 = vadd.xlane.f32.xlu0 %v2084
    %v2086 = vpop.xlane.xlu0 %2085
    %v2087 = vrcp.pop %v2086
    %v2088 = vmul.f32 %v2083, %v2087
    %v2090 = vsel %vm207, %v2088, 0
    %2092 = vmatprep.subr.mxu0 0.0
    %2093 = vmatpush1.msra.mxu0 %v1839
    %2094 = vmatprep.subr.mxu0 0.0
    %2095 = vmatpush1.msra.mxu0 0.0
    %2096 = vmatprep.subr.mxu0 0.0
    %2097 = vmatpush1.msra.mxu0 0.0
    %2098 = vmatprep.subr.mxu0 0.0
    %2099 = vmatpush1.msra.mxu0 0.0
    %2100 = vmatprep.subr.mxu0 0.0
    %2101 = vmatpush1.msra.mxu0 0.0
    %2102 = vmatprep.subr.mxu0 0.0
    %2103 = vmatpush1.msra.mxu0 0.0
    %2104 = vmatprep.subr.mxu0 0.0
    %2105 = vmatpush1.msra.mxu0 0.0
    %2106 = vmatprep.subr.mxu0 0.0
    %2107 = vmatpush1.msra.mxu0 0.0
    %2108 = vmatprep.subr.mxu0 0.0
    %2109 = vmatpush1.msra.mxu0 0.0
    %2110 = vmatprep.subr.mxu0 0.0
    %2111 = vmatpush1.msra.mxu0 0.0
    %2112 = vmatprep.subr.mxu0 0.0
    %2113 = vmatpush1.msra.mxu0 0.0
    %2114 = vmatprep.subr.mxu0 0.0
    %2115 = vmatpush1.msra.mxu0 0.0
    %2116 = vmatprep.subr.mxu0 0.0
    %2117 = vmatpush1.msra.mxu0 0.0
    %2118 = vmatprep.subr.mxu0 0.0
    %2119 = vmatpush1.msra.mxu0 0.0
    %2120 = vmatprep.subr.mxu0 0.0
    %2121 = vmatpush1.msra.mxu0 0.0
    %2122 = vmatprep.subr.mxu0 0.0
    %2123 = vmatpush1.msra.mxu0 0.0
    %2124 = vmatprep.subr.mxu0 0.0
    %2125 = vmatpush1.msra.mxu0 0.0
    %2126 = vmatprep.subr.mxu0 0.0
    %2127 = vmatpush1.msra.mxu0 0.0
    %2128 = vmatprep.subr.mxu0 0.0
    %2129 = vmatpush1.msra.mxu0 0.0
    %2130 = vmatprep.subr.mxu0 0.0
    %2131 = vmatpush1.msra.mxu0 0.0
    %2132 = vmatprep.subr.mxu0 0.0
    %2133 = vmatpush1.msra.mxu0 0.0
    %2134 = vmatprep.subr.mxu0 0.0
    %2135 = vmatpush1.msra.mxu0 0.0
    %2136 = vmatprep.subr.mxu0 0.0
    %2137 = vmatpush1.msra.mxu0 0.0
    %2138 = vmatprep.subr.mxu0 0.0
    %2139 = vmatpush1.msra.mxu0 0.0
    %2140 = vmatprep.subr.mxu0 0.0
    %2141 = vmatpush1.msra.mxu0 0.0
    %2142 = vmatprep.subr.mxu0 0.0
    %2143 = vmatpush1.msra.mxu0 0.0
    %2144 = vmatprep.subr.mxu0 0.0
    %2145 = vmatpush1.msra.mxu0 0.0
    %2146 = vmatprep.subr.mxu0 0.0
    %2147 = vmatpush1.msra.mxu0 0.0
    %2148 = vmatprep.subr.mxu0 0.0
    %2149 = vmatpush1.msra.mxu0 0.0
    %2150 = vmatprep.subr.mxu0 0.0
    %2151 = vmatpush1.msra.mxu0 0.0
    %2152 = vmatprep.subr.mxu0 0.0
    %2153 = vmatpush1.msra.mxu0 0.0
    %2154 = vmatprep.subr.mxu0 0.0
    %2155 = vmatpush1.msra.mxu0 0.0
    %2156 = vmatprep.mubr.f32.mxu0 0.0
    %2157 = vmatmul.mubr.f32.gmra.mrb[0].mxu0 %v2090
    %v2158 = vpop.f32.mrb[0].mxu0
    %v2159 = vadd.f32 0.0, %v2158
    %v2160 = vpop.f32.mrb[0].mxu0
    %2161 = vdwg.mxu0
    %v2162 = vpack.c.bf16 %v2159, %v1999
    %s2163 = scalar_lea.vmem %s4, 12
    %v2164 = vld [vmem:[%s2163] sm:$0xf]
    %v2166 = vsel %vm207, %v2162, 0
    %v2169 = vsel %vm1030, %v2164, 0
    %2171 = vmatprep.subr.bf16.mxu0 0
    %2172 = vmatpush1.bf16.msra.mxu0 %v2169
    %2173 = vmatprep.subr.bf16.mxu0 0
    %2174 = vmatpush1.bf16.msra.mxu0 0
    %2175 = vmatprep.subr.bf16.mxu0 0
    %2176 = vmatpush1.bf16.msra.mxu0 0
    %2177 = vmatprep.subr.bf16.mxu0 0
    %2178 = vmatpush1.bf16.msra.mxu0 0
    %2179 = vmatprep.subr.bf16.mxu0 0
    %2180 = vmatpush1.bf16.msra.mxu0 0
    %2181 = vmatprep.subr.bf16.mxu0 0
    %2182 = vmatpush1.bf16.msra.mxu0 0
    %2183 = vmatprep.subr.bf16.mxu0 0
    %2184 = vmatpush1.bf16.msra.mxu0 0
    %2185 = vmatprep.subr.bf16.mxu0 0
    %2186 = vmatpush1.bf16.msra.mxu0 0
    %2187 = vmatprep.subr.bf16.mxu0 0
    %2188 = vmatpush1.bf16.msra.mxu0 0
    %2189 = vmatprep.subr.bf16.mxu0 0
    %2190 = vmatpush1.bf16.msra.mxu0 0
    %2191 = vmatprep.subr.bf16.mxu0 0
    %2192 = vmatpush1.bf16.msra.mxu0 0
    %2193 = vmatprep.subr.bf16.mxu0 0
    %2194 = vmatpush1.bf16.msra.mxu0 0
    %2195 = vmatprep.subr.bf16.mxu0 0
    %2196 = vmatpush1.bf16.msra.mxu0 0
    %2197 = vmatprep.subr.bf16.mxu0 0
    %2198 = vmatpush1.bf16.msra.mxu0 0
    %2199 = vmatprep.subr.bf16.mxu0 0
    %2200 = vmatpush1.bf16.msra.mxu0 0
    %2201 = vmatprep.subr.bf16.mxu0 0
    %2202 = vmatpush1.bf16.msra.mxu0 0
    %2203 = vmatprep.mubr.bf16.mxu0 0
    %2204 = vmatmul.mubr.bf16.gmra.mrb[0].mxu0 %v2166
    %v2205 = vpop.f32.mrb[0].mxu0
    %v2206 = vadd.f32 0.0, %v2205
    %v2207 = vpop.f32.mrb[0].mxu0
    %v2208 = vpop.f32.mrb[0].mxu0
    %v2209 = vadd.f32 0.0, %v2208
    %v2210 = vpop.f32.mrb[0].mxu0
    %2211 = vdwg.mxu0
    %v2212 = vadd.f32 %v1666, %v2206
    %v2213 = vadd.f32 %v1667, %v2209
    %v2214 = vld [vmem:[%s5] sm:$0x1]
    %v2216 = vlaneseq
    %v2217 = vshrl.u32 %v2216, 7
    %v2218 = vsub.s32 0, %v2217
    %v2219 = vrot.slane %v2214, %v2218
    %v2221 = vadd.f32 %v2212, %v2219
    %v2222 = vadd.f32 %v2213, %v2219
    %2223 = vst.msk [vmem:[#allocation2] sm:$0xff] %vm48, %v2221
    %2224 = vst.msk [vmem:[#allocation2 + $0x8] sm:$0xff] %vm48, %v2222
    // Predicated region
    $region26: #{tpu_custom_call.1} parent=1 // pred_check
      _
    $region27: #{tpu_custom_call.1} parent=1 // pred_check_branch
      %2226 = sbr.rel (0) target = $region29
    $region28: #{tpu_custom_call.1} parent=1 // pred_region
      %s2228 = ssub.s32 256, 256
      %2229 = vsyncadd [#allocation3], %s2228
      %s2230 = sshll.u32 [#allocation2], 4
      %s2231 = int_to_ptr.vmem [resolvable:$true] %s2230
      %2236 = dma.vmem_to_hbm [thread:$0]  %s2231, 256, %s6, [#allocation3], 128, 128, 8
    $region29: #{tpu_custom_call.1} parent=1 // pred_fallthru
      _
    // Predicated region
    $region30: #{tpu_custom_call.1} parent=1 // pred_check
      _
    $region31: #{tpu_custom_call.1} parent=1 // pred_check_branch
      %2238 = sbr.rel (0) target = $region33
    $region32: #{tpu_custom_call.1} parent=1 // pred_region
      %2239 = dma.done [#allocation3], 256
    $region33: #{tpu_custom_call.1} parent=1 // pred_fallthru
      _
    %2240 = vsyncpa [#allocation3], 1

</llo_original>
